<compile_context>
chip_gen: v7x
topology: tpu7x:2x2x1
jax: 0.10.0
libtpu: 0.0.40
codegen_flags: <defaults>
</compile_context>

<pallas_src>
import jax
import jax.numpy as jnp
from jax.experimental import pallas as pl
from jax.experimental.pallas import tpu as pltpu


def trigram_kernel(ids_ref, emb_ref, w1_ref, b1_ref, w2_ref, b2_ref, out_ref):
    # ids: (TM, C) int32 ; emb: (V, E) bf16 ; w1: (C*E, H) bf16 ; b1: (1, H) f32
    # w2: (H, V) bf16    ; b2: (1, V) f32   ; out: (TM, V) f32
    tm, C = ids_ref.shape
    V, E = emb_ref.shape
    H = w1_ref.shape[1]

    ids = ids_ref[...]                                   # (TM, C) int32
    emb = emb_ref[...]                                   # (V, E) bf16
    lane_ids = jax.lax.broadcasted_iota(jnp.int32, (tm, V), 1)

    # Fused embedding lookup: one-hot(ids_c) @ emb on the MXU, per context
    # position; feed each (TM, E) slab straight into its slice of w1 so the
    # (TM, C*E) activation never exists in HBM (and no in-kernel reshape).
    h_acc = jnp.zeros((tm, H), jnp.float32)
    for c in range(C):  # static Python loop, context_size is tiny (2)
        onehot = (ids[:, c:c + 1] == lane_ids).astype(emb.dtype)        # (TM, V)
        x_c = jnp.dot(onehot, emb, preferred_element_type=jnp.float32)  # (TM, E)
        w1_c = w1_ref[c * E:(c + 1) * E, :]                             # (E, H)
        h_acc = h_acc + jnp.dot(x_c.astype(emb.dtype), w1_c,
                                preferred_element_type=jnp.float32)

    # f32 tanh (v5e has no bf16 EUP; on v6e/v7x a bf16 tanh would also be fine).
    h = jnp.tanh(h_acc + b1_ref[...])

    logits = (
        jnp.dot(h.astype(w2_ref.dtype), w2_ref[...],
                preferred_element_type=jnp.float32)
        + b2_ref[...]
    )

    # log_softmax along the vocab axis (dim=1 in the PyTorch module), in f32.
    m = jnp.max(logits, axis=-1, keepdims=True)
    shifted = logits - m
    lse = jnp.log(jnp.sum(jnp.exp(shifted), axis=-1, keepdims=True))
    out_ref[...] = shifted - lse


def trigram_forward(inputs, emb_table, w1, b1, w2, b2, *, tm=256):
    """inputs: (B, context) int token ids.  Returns (B, vocab) f32 log-probs."""
    B, C = inputs.shape
    V, E = emb_table.shape
    K1 = C * E
    H = w1.shape[1]
    assert w1.shape[0] == K1 and w2.shape == (H, V)

    # Pad only the tiny int32 id array to a multiple of the row tile.
    n_tiles = pl.cdiv(B, tm)
    Bp = n_tiles * tm
    ids = inputs.astype(jnp.int32)
    if Bp != B:
        ids = jnp.pad(ids, ((0, Bp - B), (0, 0)))  # token 0 for pad rows (trimmed)

    # bf16 matmul operands; f32 biases for the f32 epilogue.
    emb_bf = emb_table.astype(jnp.bfloat16)
    w1_bf = w1.astype(jnp.bfloat16)
    w2_bf = w2.astype(jnp.bfloat16)
    b1_f = b1.reshape(1, H).astype(jnp.float32)
    b2_f = b2.reshape(1, V).astype(jnp.float32)

    # Honest VMEM budget: pipeline buffers counted once each (x2 where Pallas
    # double-buffers), plus headroom for in-kernel temporaries.
    vmem_needed = (
        2 * tm * C * 4          # id tiles (int32, double-buffered)
        + 2 * V * E * 2         # emb table (bf16, resident; both pipeline bufs)
        + 2 * K1 * H * 2        # w1 (bf16, resident)
        + 2 * H * V * 2         # w2 (bf16, resident)
        + 2 * (H + V) * 4       # biases (f32)
        + 2 * tm * V * 4        # out tiles (f32, double-buffered)
    )
    temporaries = 3 * tm * V * 4 + tm * H * 4  # one-hot / logits / h slabs
    vmem_limit = int(min(64 << 20, max(8 << 20, vmem_needed + temporaries + (2 << 20))))

    cost = pl.CostEstimate(
        flops=2 * Bp * (C * V * E + K1 * H + H * V),
        transcendentals=Bp * (H + V),            # tanh + exp
        bytes_accessed=(Bp * C * 4               # ids
                        + V * E * 2              # table
                        + K1 * H * 2 + H * V * 2 # weights
                        + (H + V) * 4            # biases
                        + Bp * V * 4),           # out (f32)
    )

    out = pl.pallas_call(
        trigram_kernel,
        out_shape=jax.ShapeDtypeStruct((Bp, V), jnp.float32),
        grid=(n_tiles,),
        in_specs=[
            pl.BlockSpec((tm, C), lambda i: (i, 0)),   # token ids: tiled over batch
            pl.BlockSpec((V, E), lambda i: (0, 0)),    # emb table: VMEM-resident
            pl.BlockSpec((K1, H), lambda i: (0, 0)),   # w1: VMEM-resident
            pl.BlockSpec((1, H), lambda i: (0, 0)),    # b1: VMEM-resident
            pl.BlockSpec((H, V), lambda i: (0, 0)),    # w2: VMEM-resident
            pl.BlockSpec((1, V), lambda i: (0, 0)),    # b2: VMEM-resident
        ],
        out_specs=pl.BlockSpec((tm, V), lambda i: (i, 0)),
        compiler_params=pltpu.CompilerParams(
            dimension_semantics=("parallel",),
            vmem_limit_bytes=vmem_limit,
        ),
        cost_estimate=cost,
    )(ids, emb_bf, w1_bf, b1_f, w2_bf, b2_f)

    return out[:B]


def reference_forward_f32(inputs, emb_table, w1, b1, w2, b2):
    B = inputs.shape[0]
    x = jnp.take(emb_table, inputs, axis=0).reshape(B, -1)
    h = jnp.tanh(x @ w1 + b1.reshape(1, -1))
    logits = h @ w2 + b2.reshape(1, -1)
    return jax.nn.log_softmax(logits, axis=1)


def reference_forward_bf16(inputs, emb_table, w1, b1, w2, b2):
    """Mirrors the kernel's mixed precision (bf16 table/matmuls, f32 epilogue)."""
    B = inputs.shape[0]
    x = jnp.take(emb_table.astype(jnp.bfloat16), inputs, axis=0).reshape(B, -1)
    h = jnp.tanh(
        jnp.dot(x, w1.astype(jnp.bfloat16), preferred_element_type=jnp.float32)
        + b1.reshape(1, -1).astype(jnp.float32)
    )
    logits = (
        jnp.dot(h.astype(jnp.bfloat16), w2.astype(jnp.bfloat16),
                preferred_element_type=jnp.float32)
        + b2.reshape(1, -1).astype(jnp.float32)
    )
    return jax.nn.log_softmax(logits, axis=1)


if __name__ == "__main__":
    # Small but tile-friendly sizes consistent with the module's constructor.
    vocab_size = 256
    embedding_dim = 64
    context_size = 2
    hidden = 256
    batch = 512        # 2 grid steps of TM=256 rows -> pipelined, both v7x TCs busy

    key = jax.random.PRNGKey(0)
    k_emb, k_w1, k_b1, k_w2, k_b2, k_in = jax.random.split(key, 6)

    emb_table = jax.random.normal(k_emb, (vocab_size, embedding_dim), jnp.float32) * 0.1
    # Linear weights stored pre-transposed as (in_features, out_features).
    w1 = jax.random.normal(
        k_w1, (context_size * embedding_dim, hidden), jnp.float32) * 0.05
    b1 = jax.random.normal(k_b1, (1, hidden), jnp.float32) * 0.01
    w2 = jax.random.normal(k_w2, (hidden, vocab_size), jnp.float32) * 0.05
    b2 = jax.random.normal(k_b2, (1, vocab_size), jnp.float32) * 0.01

    inputs = jax.random.randint(k_in, (batch, context_size), 0, vocab_size, jnp.int32)

    log_probs = trigram_forward(inputs, emb_table, w1, b1, w2, b2)
    jax.block_until_ready(log_probs)
    assert log_probs.shape == (batch, vocab_size)

    # Tight check against a reference with matching mixed precision.
    ref_bf16 = reference_forward_bf16(inputs, emb_table, w1, b1, w2, b2)
    assert jnp.allclose(log_probs, ref_bf16, atol=2e-3, rtol=2e-3)

    # Loose check against the pure-f32 PyTorch-equivalent reference.
    ref_f32 = reference_forward_f32(inputs, emb_table, w1, b1, w2, b2)
    assert jnp.allclose(log_probs, ref_f32, atol=5e-2, rtol=5e-2)

    # Rows are valid log-prob distributions.
    assert jnp.allclose(jnp.sum(jnp.exp(log_probs), axis=1), 1.0, atol=1e-3)

    # Ragged batch (exercises the id-only padding + trim path).
    inputs_small = inputs[:50]
    log_probs_small = trigram_forward(inputs_small, emb_table, w1, b1, w2, b2)
    jax.block_until_ready(log_probs_small)
    ref_small = reference_forward_bf16(inputs_small, emb_table, w1, b1, w2, b2)
    assert log_probs_small.shape == (50, vocab_size)
    assert jnp.allclose(log_probs_small, ref_small, atol=2e-3, rtol=2e-3)

    print("KERNEL_OK")
</pallas_src>

<mosaic_0001>
module attributes {stable_mosaic.version = 11 : i64} {
  func.func @trigram_kernel(%arg0: i32, %arg1: memref<256x2xi32, #tpu.memory_space<vmem>>, %arg2: memref<256x64xbf16, #tpu.memory_space<vmem>>, %arg3: memref<128x256xbf16, #tpu.memory_space<vmem>>, %arg4: memref<1x256xf32, #tpu.memory_space<vmem>>, %arg5: memref<256x256xbf16, #tpu.memory_space<vmem>>, %arg6: memref<1x256xf32, #tpu.memory_space<vmem>>, %arg7: memref<256x256xf32, #tpu.memory_space<vmem>>) attributes {dimension_semantics = [#tpu.dimension_semantics<parallel>], iteration_bounds = array<i64: 2>, scalar_prefetch = 0 : i64, scratch_operands = 0 : i64, tpu.core_type = #tpu.core_type<tc>, window_params = [{transform_indices = @transform_0, window_bounds = array<i64: 256, 2>}, {pipeline_mode = #tpu.pipeline_mode<synchronous>, transform_indices = @transform_1, window_bounds = array<i64: 256, 64>}, {pipeline_mode = #tpu.pipeline_mode<synchronous>, transform_indices = @transform_2, window_bounds = array<i64: 128, 256>}, {pipeline_mode = #tpu.pipeline_mode<synchronous>, transform_indices = @transform_3, window_bounds = array<i64: 1, 256>}, {pipeline_mode = #tpu.pipeline_mode<synchronous>, transform_indices = @transform_4, window_bounds = array<i64: 256, 256>}, {pipeline_mode = #tpu.pipeline_mode<synchronous>, transform_indices = @transform_5, window_bounds = array<i64: 1, 256>}, {transform_indices = @transform_6, window_bounds = array<i64: 256, 256>}]} {
    %c0 = arith.constant 0 : index
    %c0_0 = arith.constant 0 : index
    %0 = vector.load %arg1[%c0, %c0_0] : memref<256x2xi32, #tpu.memory_space<vmem>>, vector<256x2xi32>
    %c0_1 = arith.constant 0 : index
    %c0_2 = arith.constant 0 : index
    %1 = vector.load %arg2[%c0_1, %c0_2] : memref<256x64xbf16, #tpu.memory_space<vmem>>, vector<256x64xbf16>
    %2 = tpu.iota {dimensions = array<i32: 1>} : vector<256x256xi32>
    %cst = arith.constant 0.000000e+00 : f32
    %3 = vector.broadcast %cst : f32 to vector<256x256xf32>
    %4 = vector.extract_strided_slice %0 {offsets = [0, 0], sizes = [256, 1], strides = [1, 1]} : vector<256x2xi32> to vector<256x1xi32>
    %5 = vector.broadcast %4 : vector<256x1xi32> to vector<256x256xi32>
    %6 = arith.cmpi eq, %5, %2 : vector<256x256xi32>
    %7 = arith.extui %6 : vector<256x256xi1> to vector<256x256xi32>
    %8 = arith.sitofp %7 : vector<256x256xi32> to vector<256x256xf32>
    %9 = arith.truncf %8 : vector<256x256xf32> to vector<256x256xbf16>
    %cst_3 = arith.constant dense<0.000000e+00> : vector<256x64xf32>
    %10 = tpu.matmul %9, %1, %cst_3 {dimension_numbers = #tpu.dot_dimension_numbers<[1], [0], [0], [1], [0, 0, 1, 1], [], []>} : vector<256x256xbf16>, vector<256x64xbf16>, vector<256x64xf32> -> vector<256x64xf32>
    %c0_4 = arith.constant 0 : index
    %c0_5 = arith.constant 0 : index
    %11 = vector.load %arg3[%c0_4, %c0_5] : memref<128x256xbf16, #tpu.memory_space<vmem>>, vector<64x256xbf16>
    %12 = arith.truncf %10 : vector<256x64xf32> to vector<256x64xbf16>
    %cst_6 = arith.constant dense<0.000000e+00> : vector<256x256xf32>
    %13 = tpu.matmul %12, %11, %cst_6 {dimension_numbers = #tpu.dot_dimension_numbers<[1], [0], [0], [1], [0, 0, 1, 1], [], []>} : vector<256x64xbf16>, vector<64x256xbf16>, vector<256x256xf32> -> vector<256x256xf32>
    %14 = arith.addf %3, %13 : vector<256x256xf32>
    %15 = vector.extract_strided_slice %0 {offsets = [0, 1], sizes = [256, 1], strides = [1, 1]} : vector<256x2xi32> to vector<256x1xi32>
    %16 = vector.broadcast %15 : vector<256x1xi32> to vector<256x256xi32>
    %17 = arith.cmpi eq, %16, %2 : vector<256x256xi32>
    %18 = arith.extui %17 : vector<256x256xi1> to vector<256x256xi32>
    %19 = arith.sitofp %18 : vector<256x256xi32> to vector<256x256xf32>
    %20 = arith.truncf %19 : vector<256x256xf32> to vector<256x256xbf16>
    %cst_7 = arith.constant dense<0.000000e+00> : vector<256x64xf32>
    %21 = tpu.matmul %20, %1, %cst_7 {dimension_numbers = #tpu.dot_dimension_numbers<[1], [0], [0], [1], [0, 0, 1, 1], [], []>} : vector<256x256xbf16>, vector<256x64xbf16>, vector<256x64xf32> -> vector<256x64xf32>
    %c64 = arith.constant 64 : index
    %c0_8 = arith.constant 0 : index
    %22 = vector.load %arg3[%c64, %c0_8] : memref<128x256xbf16, #tpu.memory_space<vmem>>, vector<64x256xbf16>
    %23 = arith.truncf %21 : vector<256x64xf32> to vector<256x64xbf16>
    %cst_9 = arith.constant dense<0.000000e+00> : vector<256x256xf32>
    %24 = tpu.matmul %23, %22, %cst_9 {dimension_numbers = #tpu.dot_dimension_numbers<[1], [0], [0], [1], [0, 0, 1, 1], [], []>} : vector<256x64xbf16>, vector<64x256xbf16>, vector<256x256xf32> -> vector<256x256xf32>
    %25 = arith.addf %14, %24 : vector<256x256xf32>
    %c0_10 = arith.constant 0 : index
    %c0_11 = arith.constant 0 : index
    %26 = vector.load %arg4[%c0_10, %c0_11] : memref<1x256xf32, #tpu.memory_space<vmem>>, vector<1x256xf32>
    %27 = vector.broadcast %26 : vector<1x256xf32> to vector<256x256xf32>
    %28 = arith.addf %25, %27 : vector<256x256xf32>
    %29 = math.tanh %28 : vector<256x256xf32>
    %30 = arith.truncf %29 : vector<256x256xf32> to vector<256x256xbf16>
    %c0_12 = arith.constant 0 : index
    %c0_13 = arith.constant 0 : index
    %31 = vector.load %arg5[%c0_12, %c0_13] : memref<256x256xbf16, #tpu.memory_space<vmem>>, vector<256x256xbf16>
    %cst_14 = arith.constant dense<0.000000e+00> : vector<256x256xf32>
    %32 = tpu.matmul %30, %31, %cst_14 {dimension_numbers = #tpu.dot_dimension_numbers<[1], [0], [0], [1], [0, 0, 1, 1], [], []>} : vector<256x256xbf16>, vector<256x256xbf16>, vector<256x256xf32> -> vector<256x256xf32>
    %c0_15 = arith.constant 0 : index
    %c0_16 = arith.constant 0 : index
    %33 = vector.load %arg6[%c0_15, %c0_16] : memref<1x256xf32, #tpu.memory_space<vmem>>, vector<1x256xf32>
    %34 = vector.broadcast %33 : vector<1x256xf32> to vector<256x256xf32>
    %35 = arith.addf %32, %34 : vector<256x256xf32>
    %cst_17 = arith.constant dense<0xFF800000> : vector<256xf32>
    %36 = vector.multi_reduction <maximumf>, %35, %cst_17 [1] : vector<256x256xf32> to vector<256xf32>
    %37 = vector.shape_cast %36 : vector<256xf32> to vector<256x1xf32>
    %38 = vector.broadcast %37 : vector<256x1xf32> to vector<256x256xf32>
    %39 = arith.subf %35, %38 : vector<256x256xf32>
    %40 = math.exp %39 : vector<256x256xf32>
    %cst_18 = arith.constant dense<0.000000e+00> : vector<256xf32>
    %41 = vector.multi_reduction <add>, %40, %cst_18 [1] : vector<256x256xf32> to vector<256xf32>
    %42 = vector.shape_cast %41 : vector<256xf32> to vector<256x1xf32>
    %43 = math.log %42 : vector<256x1xf32>
    %44 = vector.broadcast %43 : vector<256x1xf32> to vector<256x256xf32>
    %45 = arith.subf %39, %44 : vector<256x256xf32>
    %c0_19 = arith.constant 0 : index
    %c0_20 = arith.constant 0 : index
    %46 = vector.load %arg7[%c0_19, %c0_20] : memref<256x256xf32, #tpu.memory_space<vmem>>, vector<256x256xf32>
    tpu.vector_store %arg7[%c0_19, %c0_20], %45 {strides = array<i32>} : memref<256x256xf32, #tpu.memory_space<vmem>>, vector<256x256xf32>,
    return
  }
  func.func @transform_0(%arg0: i32) -> (i32, i32) {
    %c0_i32 = arith.constant 0 : i32
    %c0_i32_0 = arith.constant 0 : i32
    return %arg0, %c0_i32 : i32, i32
  }
  func.func @transform_1(%arg0: i32) -> (i32, i32) {
    %c0_i32 = arith.constant 0 : i32
    %c0_i32_0 = arith.constant 0 : i32
    %c0_i32_1 = arith.constant 0 : i32
    return %c0_i32, %c0_i32_0 : i32, i32
  }
  func.func @transform_2(%arg0: i32) -> (i32, i32) {
    %c0_i32 = arith.constant 0 : i32
    %c0_i32_0 = arith.constant 0 : i32
    %c0_i32_1 = arith.constant 0 : i32
    return %c0_i32, %c0_i32_0 : i32, i32
  }
  func.func @transform_3(%arg0: i32) -> (i32, i32) {
    %c0_i32 = arith.constant 0 : i32
    %c0_i32_0 = arith.constant 0 : i32
    %c0_i32_1 = arith.constant 0 : i32
    return %c0_i32, %c0_i32_0 : i32, i32
  }
  func.func @transform_4(%arg0: i32) -> (i32, i32) {
    %c0_i32 = arith.constant 0 : i32
    %c0_i32_0 = arith.constant 0 : i32
    %c0_i32_1 = arith.constant 0 : i32
    return %c0_i32, %c0_i32_0 : i32, i32
  }
  func.func @transform_5(%arg0: i32) -> (i32, i32) {
    %c0_i32 = arith.constant 0 : i32
    %c0_i32_0 = arith.constant 0 : i32
    %c0_i32_1 = arith.constant 0 : i32
    return %c0_i32, %c0_i32_0 : i32, i32
  }
  func.func @transform_6(%arg0: i32) -> (i32, i32) {
    %c0_i32 = arith.constant 0 : i32
    %c0_i32_0 = arith.constant 0 : i32
    return %arg0, %c0_i32 : i32, i32
  }
}

</mosaic_0001>

<llo_original>
// kernel: tpu_custom_call.1
$region0: #{tpu_custom_call.1}
  #allocation0 [shape = 'u32[]', space=smem, size = 0x4, offset = 0x4, fixed_abs, tag = 'smem constant byte address 0x4 - core index']
  #allocation1 [shape = 'u32[144,128]{1,0:T(1,128)}', space=vmem, size = 0x12000, scoped, tag = 'internal scratch']
  %s0 = inlined_call_operand.vmem [shape: s32[512,2], index: 0, kind: input, shape index: {}]
  %s1 = inlined_call_operand.vmem [shape: bf16[256,64], index: 1, kind: input, shape index: {}]
  %s2 = inlined_call_operand.vmem [shape: bf16[128,256], index: 2, kind: input, shape index: {}]
  %s3 = inlined_call_operand.vmem [shape: f32[1,256], index: 3, kind: input, shape index: {}]
  %s4 = inlined_call_operand.vmem [shape: bf16[256,256], index: 4, kind: input, shape index: {}]
  %s5 = inlined_call_operand.vmem [shape: f32[1,256], index: 5, kind: input, shape index: {}]
  %s6 = inlined_call_operand.hbm [shape: f32[512,256], index: 6, kind: output, shape index: {}]
  %s7 = sld [smem:[#allocation0]]
  $region57: #{tpu_custom_call.1} parent=0
    _
  %s9 = ssub.s32 1, %s7
  %s10 = scalar_select 0, %s9, %s7
  $region1: #{tpu_custom_call.1} parent=0
    #allocation2 [shape = 'u8[524288]{0}', space=vmem, size = 0x80000, scoped, tag = 'output window, operand 0']
    #allocation3 [shape = 's32[2]{0}', space=sflag, size = 0x8, scoped, tag = 'scoped memory for tpu_custom_call.1']
    %11 = vsyncpa [#allocation3], 0
    %s12 = scalar_lea.sflag [#allocation3], 1
    %13 = vsyncpa %s12, 0
    loop: start=0, step=1, limit=4
    $region2: #{tpu_custom_call.1} parent=1 // loop_pre_header
      _
    $region3: #{tpu_custom_call.1} parent=1 // loop_header
      %s15 = sphi 0, %s19
      %p16 = scmp.ge.s32.totalorder %s15, 4
      %s25 = sphi 0, %s27
      %s28 = sphi 0, %s25
      %s29 = sphi 0, %s28
      %s45 = sphi 0, %s29
      %s49 = sphi 0, %s49
      %s51 = sphi 0, %s49
      %s52 = sphi 0, %s51
      %s66 = sphi 0, %s52
      %s70 = sphi 0, %s70
      %s72 = sphi 0, %s70
      %s73 = sphi 0, %s72
      %s87 = sphi 0, %s73
      %s91 = sphi 0, %s91
      %s93 = sphi 0, %s91
      %s94 = sphi 0, %s93
      %s108 = sphi 0, %s94
      %s112 = sphi 0, %s112
      %s114 = sphi 0, %s112
      %s115 = sphi 0, %s114
      %s129 = sphi 0, %s115
      %s133 = sphi 0, %s133
      %s135 = sphi 0, %s133
      %s136 = sphi 0, %s135
      %s150 = sphi 0, %s136
      %s156 = sphi 0, %s158
      %s159 = sphi 0, %s156
      %s160 = sphi 0, %s159
      %s176 = sphi 0, %s160
    $region4: #{tpu_custom_call.1} parent=1 // loop_header_branch
      %18 = sbr.rel (%p16) target = $region8
    $region5: #{tpu_custom_call.1} parent=1 // loop_body
      %s20 = ssub.s32 %s15, 1
      %s21 = ssub.s32 %s15, 2
      %s22 = sadd.s32 %s15, 1
      %s23 = ssub.s32 %s15, %s22
      %p24 = scmp.eq.s32.totalorder %s23, 0
      %s26 = sadd.s32 %s25, 1
      %s27 = scalar_select %p24, %s25, %s26
      %p30 = pneg %p24
      %p31 = scmp.eq.s32.totalorder %s15, 1
      %p32 = por %p30, %p31
      %p33 = scmp.ne.s32.totalorder %s25, %s28
      %p34 = scmp.eq.s32.totalorder %s15, 0
      %p35 = por %p33, %p34
      %p36 = scmp.ne.s32.totalorder %s25, %s28
      %p37 = scmp.eq.s32.totalorder %s20, 1
      %p38 = por %p36, %p37
      %p39 = scmp.ne.s32.totalorder %s28, %s29
      %p40 = scmp.eq.s32.totalorder %s20, 0
      %p41 = por %p39, %p40
      %p42 = scmp.ne.s32.totalorder %s28, %s29
      %p43 = scmp.eq.s32.totalorder %s21, 1
      %p44 = por %p42, %p43
      %p46 = scmp.ne.s32.totalorder %s29, %s45
      %p47 = scmp.eq.s32.totalorder %s21, 0
      %p48 = por %p46, %p47
      %s50 = sadd.s32 %s49, 1
      %p53 = scmp.eq.s32.totalorder %s15, 1
      %p54 = scmp.ne.s32.totalorder %s49, %s51
      %p55 = scmp.eq.s32.totalorder %s15, 0
      %p56 = por %p54, %p55
      %p57 = scmp.ne.s32.totalorder %s49, %s51
      %p58 = scmp.eq.s32.totalorder %s20, 1
      %p59 = por %p57, %p58
      %p60 = scmp.ne.s32.totalorder %s51, %s52
      %p61 = scmp.eq.s32.totalorder %s20, 0
      %p62 = por %p60, %p61
      %p63 = scmp.ne.s32.totalorder %s51, %s52
      %p64 = scmp.eq.s32.totalorder %s21, 1
      %p65 = por %p63, %p64
      %p67 = scmp.ne.s32.totalorder %s52, %s66
      %p68 = scmp.eq.s32.totalorder %s21, 0
      %p69 = por %p67, %p68
      %s71 = sadd.s32 %s70, 1
      %p74 = scmp.eq.s32.totalorder %s15, 1
      %p75 = scmp.ne.s32.totalorder %s70, %s72
      %p76 = scmp.eq.s32.totalorder %s15, 0
      %p77 = por %p75, %p76
      %p78 = scmp.ne.s32.totalorder %s70, %s72
      %p79 = scmp.eq.s32.totalorder %s20, 1
      %p80 = por %p78, %p79
      %p81 = scmp.ne.s32.totalorder %s72, %s73
      %p82 = scmp.eq.s32.totalorder %s20, 0
      %p83 = por %p81, %p82
      %p84 = scmp.ne.s32.totalorder %s72, %s73
      %p85 = scmp.eq.s32.totalorder %s21, 1
      %p86 = por %p84, %p85
      %p88 = scmp.ne.s32.totalorder %s73, %s87
      %p89 = scmp.eq.s32.totalorder %s21, 0
      %p90 = por %p88, %p89
      %s92 = sadd.s32 %s91, 1
      %p95 = scmp.eq.s32.totalorder %s15, 1
      %p96 = scmp.ne.s32.totalorder %s91, %s93
      %p97 = scmp.eq.s32.totalorder %s15, 0
      %p98 = por %p96, %p97
      %p99 = scmp.ne.s32.totalorder %s91, %s93
      %p100 = scmp.eq.s32.totalorder %s20, 1
      %p101 = por %p99, %p100
      %p102 = scmp.ne.s32.totalorder %s93, %s94
      %p103 = scmp.eq.s32.totalorder %s20, 0
      %p104 = por %p102, %p103
      %p105 = scmp.ne.s32.totalorder %s93, %s94
      %p106 = scmp.eq.s32.totalorder %s21, 1
      %p107 = por %p105, %p106
      %p109 = scmp.ne.s32.totalorder %s94, %s108
      %p110 = scmp.eq.s32.totalorder %s21, 0
      %p111 = por %p109, %p110
      %s113 = sadd.s32 %s112, 1
      %p116 = scmp.eq.s32.totalorder %s15, 1
      %p117 = scmp.ne.s32.totalorder %s112, %s114
      %p118 = scmp.eq.s32.totalorder %s15, 0
      %p119 = por %p117, %p118
      %p120 = scmp.ne.s32.totalorder %s112, %s114
      %p121 = scmp.eq.s32.totalorder %s20, 1
      %p122 = por %p120, %p121
      %p123 = scmp.ne.s32.totalorder %s114, %s115
      %p124 = scmp.eq.s32.totalorder %s20, 0
      %p125 = por %p123, %p124
      %p126 = scmp.ne.s32.totalorder %s114, %s115
      %p127 = scmp.eq.s32.totalorder %s21, 1
      %p128 = por %p126, %p127
      %p130 = scmp.ne.s32.totalorder %s115, %s129
      %p131 = scmp.eq.s32.totalorder %s21, 0
      %p132 = por %p130, %p131
      %s134 = sadd.s32 %s133, 1
      %p137 = scmp.eq.s32.totalorder %s15, 1
      %p138 = scmp.ne.s32.totalorder %s133, %s135
      %p139 = scmp.eq.s32.totalorder %s15, 0
      %p140 = por %p138, %p139
      %p141 = scmp.ne.s32.totalorder %s133, %s135
      %p142 = scmp.eq.s32.totalorder %s20, 1
      %p143 = por %p141, %p142
      %p144 = scmp.ne.s32.totalorder %s135, %s136
      %p145 = scmp.eq.s32.totalorder %s20, 0
      %p146 = por %p144, %p145
      %p147 = scmp.ne.s32.totalorder %s135, %s136
      %p148 = scmp.eq.s32.totalorder %s21, 1
      %p149 = por %p147, %p148
      %p151 = scmp.ne.s32.totalorder %s136, %s150
      %p152 = scmp.eq.s32.totalorder %s21, 0
      %p153 = por %p151, %p152
      %s154 = ssub.s32 %s15, %s22
      %p155 = scmp.eq.s32.totalorder %s154, 0
      %s157 = sadd.s32 %s156, 1
      %s158 = scalar_select %p155, %s156, %s157
      %p161 = pneg %p155
      %p162 = scmp.eq.s32.totalorder %s15, 1
      %p163 = por %p161, %p162
      %p164 = scmp.ne.s32.totalorder %s156, %s159
      %p165 = scmp.eq.s32.totalorder %s15, 0
      %p166 = por %p164, %p165
      %p167 = scmp.ne.s32.totalorder %s156, %s159
      %p168 = scmp.eq.s32.totalorder %s20, 1
      %p169 = por %p167, %p168
      %p170 = scmp.ne.s32.totalorder %s159, %s160
      %p171 = scmp.eq.s32.totalorder %s20, 0
      %p172 = por %p170, %p171
      %p173 = scmp.ne.s32.totalorder %s159, %s160
      %p174 = scmp.eq.s32.totalorder %s21, 1
      %p175 = por %p173, %p174
      %p177 = scmp.ne.s32.totalorder %s160, %s176
      %p178 = scmp.eq.s32.totalorder %s21, 0
      %p179 = por %p177, %p178
      %p180 = scmp.le.s32.totalorder 1, %s15
      %p181 = scmp.lt.s32.totalorder %s15, 3
      %p182 = pnand %p180, %p181
      %p183 = pneg %p182
      // Predicated region
      $region9: #{tpu_custom_call.1} parent=5 // pred_check
        _
      $region10: #{tpu_custom_call.1} parent=5 // pred_check_branch
        %185 = sbr.rel (%p182) target = $region12
      $region11: #{tpu_custom_call.1} parent=5 // pred_region
        %s186 = ssub.s32 %s15, 1
        // Predicated region
        $region13: #{tpu_custom_call.1} parent=11 // pred_check
          %p187 = pneg %p62
        $region14: #{tpu_custom_call.1} parent=11 // pred_check_branch
          %189 = sbr.rel (%p187) target = $region16
        $region15: #{tpu_custom_call.1} parent=11 // pred_region
          _
        $region16: #{tpu_custom_call.1} parent=11 // pred_fallthru
          _
        // Predicated region
        $region17: #{tpu_custom_call.1} parent=11 // pred_check
          %p190 = pneg %p83
        $region18: #{tpu_custom_call.1} parent=11 // pred_check_branch
          %192 = sbr.rel (%p190) target = $region20
        $region19: #{tpu_custom_call.1} parent=11 // pred_region
          _
        $region20: #{tpu_custom_call.1} parent=11 // pred_fallthru
          _
        // Predicated region
        $region21: #{tpu_custom_call.1} parent=11 // pred_check
          %p193 = pneg %p104
        $region22: #{tpu_custom_call.1} parent=11 // pred_check_branch
          %195 = sbr.rel (%p193) target = $region24
        $region23: #{tpu_custom_call.1} parent=11 // pred_region
          _
        $region24: #{tpu_custom_call.1} parent=11 // pred_fallthru
          _
        // Predicated region
        $region25: #{tpu_custom_call.1} parent=11 // pred_check
          %p196 = pneg %p125
        $region26: #{tpu_custom_call.1} parent=11 // pred_check_branch
          %198 = sbr.rel (%p196) target = $region28
        $region27: #{tpu_custom_call.1} parent=11 // pred_region
          _
        $region28: #{tpu_custom_call.1} parent=11 // pred_fallthru
          _
        // Predicated region
        $region29: #{tpu_custom_call.1} parent=11 // pred_check
          %p199 = pneg %p146
        $region30: #{tpu_custom_call.1} parent=11 // pred_check_branch
          %201 = sbr.rel (%p199) target = $region32
        $region31: #{tpu_custom_call.1} parent=11 // pred_region
          _
        $region32: #{tpu_custom_call.1} parent=11 // pred_fallthru
          _
      $region12: #{tpu_custom_call.1} parent=5 // pred_fallthru
        _
      %p202 = scmp.lt.s32.totalorder %s15, 2
      // Predicated region
      $region33: #{tpu_custom_call.1} parent=5 // pred_check
        %p203 = pneg %p202
      $region34: #{tpu_custom_call.1} parent=5 // pred_check_branch
        %205 = sbr.rel (%p203) target = $region36
      $region35: #{tpu_custom_call.1} parent=5 // pred_region
        // Predicated region
        $region37: #{tpu_custom_call.1} parent=35 // pred_check
          %p206 = pneg %p35
        $region38: #{tpu_custom_call.1} parent=35 // pred_check_branch
          %208 = sbr.rel (%p206) target = $region40
        $region39: #{tpu_custom_call.1} parent=35 // pred_region
          %s209 = smul.u32 32, %s15
          %p210 = scmp.lt.s32.totalorder %s209, 63
          %s211 = scalar_select %p210, %s209, 63
          %s212 = smul.addr %s211, 8
          %s213 = scalar_lea.vmem %s0, %s212
          %s214 = smul.u32 32, %s15
        $region40: #{tpu_custom_call.1} parent=35 // pred_fallthru
          _
      $region36: #{tpu_custom_call.1} parent=5 // pred_fallthru
        _
      %p215 = scmp.le.s32.totalorder 1, %s15
      %p216 = scmp.lt.s32.totalorder %s15, 3
      %p217 = pnand %p215, %p216
      %p218 = pneg %p217
      // Predicated region
      $region41: #{tpu_custom_call.1} parent=5 // pred_check
        _
      $region42: #{tpu_custom_call.1} parent=5 // pred_check_branch
        %220 = sbr.rel (%p217) target = $region44
      $region43: #{tpu_custom_call.1} parent=5 // pred_region
        %s221 = ssub.s32 %s15, 1
        %s222 = smul.u32 32, %s20
        %p223 = scmp.lt.s32.totalorder %s222, 63
        %s224 = scalar_select %p223, %s222, 63
        %s225 = smul.addr %s224, 8
        %s226 = scalar_lea.vmem %s0, %s225
        %p227 = pneg %p41
        %p228 = pneg %p38
        %p229 = pneg %p62
        %p230 = pneg %p59
        %p231 = pneg %p83
        %p232 = pneg %p80
        %p233 = pneg %p104
        %p234 = pneg %p101
        %p235 = pneg %p125
        %p236 = pneg %p122
        %p237 = pneg %p146
        %p238 = pneg %p143
        %p239 = pneg %p172
        %p240 = pneg %p169
        %s241 = sand.u32 %s159, 1
        %s242 = scalar_lea.sflag [#allocation3], %s241
        %s243 = sand.u32 %s159, 1
        %s244 = smul.addr %s243, 512
        %s245 = scalar_lea.vmem [#allocation2], %s244
        %s246 = smul.u32 32, %s20
        %p247 = scmp.lt.s32.totalorder %s246, 63
        %s248 = scalar_select %p247, %s246, 63
        %s249 = smul.addr %s248, 8
        %s250 = scalar_lea.vmem %s0, %s249
        %s251 = smul.u32 32, %s20
        %s252 = smul.u32 32, %s20
        %v254 = vld [vmem:[%s250] sm:$0xff]
        %v255 = vld [vmem:[%s250 + $0x8] sm:$0xff]
        %v256 = vld [vmem:[%s250 + $0x10] sm:$0xff]
        %v257 = vld [vmem:[%s250 + $0x18] sm:$0xff]
        %v258 = vld [vmem:[%s250 + $0x20] sm:$0xff]
        %v259 = vld [vmem:[%s250 + $0x28] sm:$0xff]
        %v260 = vld [vmem:[%s250 + $0x30] sm:$0xff]
        %v261 = vld [vmem:[%s250 + $0x38] sm:$0xff]
        %v262 = vld [vmem:[%s250 + $0x40] sm:$0xff]
        %v263 = vld [vmem:[%s250 + $0x48] sm:$0xff]
        %v264 = vld [vmem:[%s250 + $0x50] sm:$0xff]
        %v265 = vld [vmem:[%s250 + $0x58] sm:$0xff]
        %v266 = vld [vmem:[%s250 + $0x60] sm:$0xff]
        %v267 = vld [vmem:[%s250 + $0x68] sm:$0xff]
        %v268 = vld [vmem:[%s250 + $0x70] sm:$0xff]
        %v269 = vld [vmem:[%s250 + $0x78] sm:$0xff]
        %v270 = vld [vmem:[%s250 + $0x80] sm:$0xff]
        %v271 = vld [vmem:[%s250 + $0x88] sm:$0xff]
        %v272 = vld [vmem:[%s250 + $0x90] sm:$0xff]
        %v273 = vld [vmem:[%s250 + $0x98] sm:$0xff]
        %v274 = vld [vmem:[%s250 + $0xa0] sm:$0xff]
        %v275 = vld [vmem:[%s250 + $0xa8] sm:$0xff]
        %v276 = vld [vmem:[%s250 + $0xb0] sm:$0xff]
        %v277 = vld [vmem:[%s250 + $0xb8] sm:$0xff]
        %v278 = vld [vmem:[%s250 + $0xc0] sm:$0xff]
        %v279 = vld [vmem:[%s250 + $0xc8] sm:$0xff]
        %v280 = vld [vmem:[%s250 + $0xd0] sm:$0xff]
        %v281 = vld [vmem:[%s250 + $0xd8] sm:$0xff]
        %v282 = vld [vmem:[%s250 + $0xe0] sm:$0xff]
        %v283 = vld [vmem:[%s250 + $0xe8] sm:$0xff]
        %v284 = vld [vmem:[%s250 + $0xf0] sm:$0xff]
        %v285 = vld [vmem:[%s250 + $0xf8] sm:$0xff]
        %v286 = vld [vmem:[%s1] sm:$0xf]
        %v287 = vld [vmem:[%s1 + $0x4] sm:$0xf]
        %v288 = vld [vmem:[%s1 + $0x8] sm:$0xf]
        %v289 = vld [vmem:[%s1 + $0xc] sm:$0xf]
        %v290 = vld [vmem:[%s1 + $0x10] sm:$0xf]
        %v291 = vld [vmem:[%s1 + $0x14] sm:$0xf]
        %v292 = vld [vmem:[%s1 + $0x18] sm:$0xf]
        %v293 = vld [vmem:[%s1 + $0x1c] sm:$0xf]
        %v294 = vld [vmem:[%s1 + $0x20] sm:$0xf]
        %v295 = vld [vmem:[%s1 + $0x24] sm:$0xf]
        %v296 = vld [vmem:[%s1 + $0x28] sm:$0xf]
        %v297 = vld [vmem:[%s1 + $0x2c] sm:$0xf]
        %v298 = vld [vmem:[%s1 + $0x30] sm:$0xf]
        %v299 = vld [vmem:[%s1 + $0x34] sm:$0xf]
        %v300 = vld [vmem:[%s1 + $0x38] sm:$0xf]
        %v301 = vld [vmem:[%s1 + $0x3c] sm:$0xf]
        %v302 = vld [vmem:[%s1 + $0x40] sm:$0xf]
        %v303 = vld [vmem:[%s1 + $0x44] sm:$0xf]
        %v304 = vld [vmem:[%s1 + $0x48] sm:$0xf]
        %v305 = vld [vmem:[%s1 + $0x4c] sm:$0xf]
        %v306 = vld [vmem:[%s1 + $0x50] sm:$0xf]
        %v307 = vld [vmem:[%s1 + $0x54] sm:$0xf]
        %v308 = vld [vmem:[%s1 + $0x58] sm:$0xf]
        %v309 = vld [vmem:[%s1 + $0x5c] sm:$0xf]
        %v310 = vld [vmem:[%s1 + $0x60] sm:$0xf]
        %v311 = vld [vmem:[%s1 + $0x64] sm:$0xf]
        %v312 = vld [vmem:[%s1 + $0x68] sm:$0xf]
        %v313 = vld [vmem:[%s1 + $0x6c] sm:$0xf]
        %v314 = vld [vmem:[%s1 + $0x70] sm:$0xf]
        %v315 = vld [vmem:[%s1 + $0x74] sm:$0xf]
        %v316 = vld [vmem:[%s1 + $0x78] sm:$0xf]
        %v317 = vld [vmem:[%s1 + $0x7c] sm:$0xf]
        %v318 = vlaneseq
        %v319 = vand.u32 %v318, 127
        %v320 = vadd.s32 %v319, 128
        %321 = vset.pattern.permute.xlu0 0
        %322 = vperm.xlu0 %321, %v254
        %v323 = vpop.permute.xlu0 %322
        %324 = vset.pattern.permute.xlu0 0
        %325 = vperm.xlu0 %324, %v255
        %v326 = vpop.permute.xlu0 %325
        %327 = vset.pattern.permute.xlu0 0
        %328 = vperm.xlu0 %327, %v256
        %v329 = vpop.permute.xlu0 %328
        %330 = vset.pattern.permute.xlu0 0
        %331 = vperm.xlu0 %330, %v257
        %v332 = vpop.permute.xlu0 %331
        %333 = vset.pattern.permute.xlu0 0
        %334 = vperm.xlu0 %333, %v258
        %v335 = vpop.permute.xlu0 %334
        %336 = vset.pattern.permute.xlu0 0
        %337 = vperm.xlu0 %336, %v259
        %v338 = vpop.permute.xlu0 %337
        %339 = vset.pattern.permute.xlu0 0
        %340 = vperm.xlu0 %339, %v260
        %v341 = vpop.permute.xlu0 %340
        %342 = vset.pattern.permute.xlu0 0
        %343 = vperm.xlu0 %342, %v261
        %v344 = vpop.permute.xlu0 %343
        %345 = vset.pattern.permute.xlu0 0
        %346 = vperm.xlu0 %345, %v262
        %v347 = vpop.permute.xlu0 %346
        %348 = vset.pattern.permute.xlu0 0
        %349 = vperm.xlu0 %348, %v263
        %v350 = vpop.permute.xlu0 %349
        %351 = vset.pattern.permute.xlu0 0
        %352 = vperm.xlu0 %351, %v264
        %v353 = vpop.permute.xlu0 %352
        %354 = vset.pattern.permute.xlu0 0
        %355 = vperm.xlu0 %354, %v265
        %v356 = vpop.permute.xlu0 %355
        %357 = vset.pattern.permute.xlu0 0
        %358 = vperm.xlu0 %357, %v266
        %v359 = vpop.permute.xlu0 %358
        %360 = vset.pattern.permute.xlu0 0
        %361 = vperm.xlu0 %360, %v267
        %v362 = vpop.permute.xlu0 %361
        %363 = vset.pattern.permute.xlu0 0
        %364 = vperm.xlu0 %363, %v268
        %v365 = vpop.permute.xlu0 %364
        %366 = vset.pattern.permute.xlu0 0
        %367 = vperm.xlu0 %366, %v269
        %v368 = vpop.permute.xlu0 %367
        %369 = vset.pattern.permute.xlu0 0
        %370 = vperm.xlu0 %369, %v270
        %v371 = vpop.permute.xlu0 %370
        %372 = vset.pattern.permute.xlu0 0
        %373 = vperm.xlu0 %372, %v271
        %v374 = vpop.permute.xlu0 %373
        %375 = vset.pattern.permute.xlu0 0
        %376 = vperm.xlu0 %375, %v272
        %v377 = vpop.permute.xlu0 %376
        %378 = vset.pattern.permute.xlu0 0
        %379 = vperm.xlu0 %378, %v273
        %v380 = vpop.permute.xlu0 %379
        %381 = vset.pattern.permute.xlu0 0
        %382 = vperm.xlu0 %381, %v274
        %v383 = vpop.permute.xlu0 %382
        %384 = vset.pattern.permute.xlu0 0
        %385 = vperm.xlu0 %384, %v275
        %v386 = vpop.permute.xlu0 %385
        %387 = vset.pattern.permute.xlu0 0
        %388 = vperm.xlu0 %387, %v276
        %v389 = vpop.permute.xlu0 %388
        %390 = vset.pattern.permute.xlu0 0
        %391 = vperm.xlu0 %390, %v277
        %v392 = vpop.permute.xlu0 %391
        %393 = vset.pattern.permute.xlu0 0
        %394 = vperm.xlu0 %393, %v278
        %v395 = vpop.permute.xlu0 %394
        %396 = vset.pattern.permute.xlu0 0
        %397 = vperm.xlu0 %396, %v279
        %v398 = vpop.permute.xlu0 %397
        %399 = vset.pattern.permute.xlu0 0
        %400 = vperm.xlu0 %399, %v280
        %v401 = vpop.permute.xlu0 %400
        %402 = vset.pattern.permute.xlu0 0
        %403 = vperm.xlu0 %402, %v281
        %v404 = vpop.permute.xlu0 %403
        %405 = vset.pattern.permute.xlu0 0
        %406 = vperm.xlu0 %405, %v282
        %v407 = vpop.permute.xlu0 %406
        %408 = vset.pattern.permute.xlu0 0
        %409 = vperm.xlu0 %408, %v283
        %v410 = vpop.permute.xlu0 %409
        %411 = vset.pattern.permute.xlu0 0
        %412 = vperm.xlu0 %411, %v284
        %v413 = vpop.permute.xlu0 %412
        %414 = vset.pattern.permute.xlu0 0
        %415 = vperm.xlu0 %414, %v285
        %v416 = vpop.permute.xlu0 %415
        %vm417 = vcmp.eq.s32.totalorder %v323, %v319
        %vm418 = vcmp.eq.s32.totalorder %v323, %v320
        %vm419 = vcmp.eq.s32.totalorder %v326, %v319
        %vm420 = vcmp.eq.s32.totalorder %v326, %v320
        %vm421 = vcmp.eq.s32.totalorder %v329, %v319
        %vm422 = vcmp.eq.s32.totalorder %v329, %v320
        %vm423 = vcmp.eq.s32.totalorder %v332, %v319
        %vm424 = vcmp.eq.s32.totalorder %v332, %v320
        %vm425 = vcmp.eq.s32.totalorder %v335, %v319
        %vm426 = vcmp.eq.s32.totalorder %v335, %v320
        %vm427 = vcmp.eq.s32.totalorder %v338, %v319
        %vm428 = vcmp.eq.s32.totalorder %v338, %v320
        %vm429 = vcmp.eq.s32.totalorder %v341, %v319
        %vm430 = vcmp.eq.s32.totalorder %v341, %v320
        %vm431 = vcmp.eq.s32.totalorder %v344, %v319
        %vm432 = vcmp.eq.s32.totalorder %v344, %v320
        %vm433 = vcmp.eq.s32.totalorder %v347, %v319
        %vm434 = vcmp.eq.s32.totalorder %v347, %v320
        %vm435 = vcmp.eq.s32.totalorder %v350, %v319
        %vm436 = vcmp.eq.s32.totalorder %v350, %v320
        %vm437 = vcmp.eq.s32.totalorder %v353, %v319
        %vm438 = vcmp.eq.s32.totalorder %v353, %v320
        %vm439 = vcmp.eq.s32.totalorder %v356, %v319
        %vm440 = vcmp.eq.s32.totalorder %v356, %v320
        %vm441 = vcmp.eq.s32.totalorder %v359, %v319
        %vm442 = vcmp.eq.s32.totalorder %v359, %v320
        %vm443 = vcmp.eq.s32.totalorder %v362, %v319
        %vm444 = vcmp.eq.s32.totalorder %v362, %v320
        %vm445 = vcmp.eq.s32.totalorder %v365, %v319
        %vm446 = vcmp.eq.s32.totalorder %v365, %v320
        %vm447 = vcmp.eq.s32.totalorder %v368, %v319
        %vm448 = vcmp.eq.s32.totalorder %v368, %v320
        %vm449 = vcmp.eq.s32.totalorder %v371, %v319
        %vm450 = vcmp.eq.s32.totalorder %v371, %v320
        %vm451 = vcmp.eq.s32.totalorder %v374, %v319
        %vm452 = vcmp.eq.s32.totalorder %v374, %v320
        %vm453 = vcmp.eq.s32.totalorder %v377, %v319
        %vm454 = vcmp.eq.s32.totalorder %v377, %v320
        %vm455 = vcmp.eq.s32.totalorder %v380, %v319
        %vm456 = vcmp.eq.s32.totalorder %v380, %v320
        %vm457 = vcmp.eq.s32.totalorder %v383, %v319
        %vm458 = vcmp.eq.s32.totalorder %v383, %v320
        %vm459 = vcmp.eq.s32.totalorder %v386, %v319
        %vm460 = vcmp.eq.s32.totalorder %v386, %v320
        %vm461 = vcmp.eq.s32.totalorder %v389, %v319
        %vm462 = vcmp.eq.s32.totalorder %v389, %v320
        %vm463 = vcmp.eq.s32.totalorder %v392, %v319
        %vm464 = vcmp.eq.s32.totalorder %v392, %v320
        %vm465 = vcmp.eq.s32.totalorder %v395, %v319
        %vm466 = vcmp.eq.s32.totalorder %v395, %v320
        %vm467 = vcmp.eq.s32.totalorder %v398, %v319
        %vm468 = vcmp.eq.s32.totalorder %v398, %v320
        %vm469 = vcmp.eq.s32.totalorder %v401, %v319
        %vm470 = vcmp.eq.s32.totalorder %v401, %v320
        %vm471 = vcmp.eq.s32.totalorder %v404, %v319
        %vm472 = vcmp.eq.s32.totalorder %v404, %v320
        %vm473 = vcmp.eq.s32.totalorder %v407, %v319
        %vm474 = vcmp.eq.s32.totalorder %v407, %v320
        %vm475 = vcmp.eq.s32.totalorder %v410, %v319
        %vm476 = vcmp.eq.s32.totalorder %v410, %v320
        %vm477 = vcmp.eq.s32.totalorder %v413, %v319
        %vm478 = vcmp.eq.s32.totalorder %v413, %v320
        %vm479 = vcmp.eq.s32.totalorder %v416, %v319
        %vm480 = vcmp.eq.s32.totalorder %v416, %v320
        %v481 = vsel %vm417, 1, 0
        %v482 = vsel %vm418, 1, 0
        %v483 = vsel %vm419, 1, 0
        %v484 = vsel %vm420, 1, 0
        %v485 = vsel %vm421, 1, 0
        %v486 = vsel %vm422, 1, 0
        %v487 = vsel %vm423, 1, 0
        %v488 = vsel %vm424, 1, 0
        %v489 = vsel %vm425, 1, 0
        %v490 = vsel %vm426, 1, 0
        %v491 = vsel %vm427, 1, 0
        %v492 = vsel %vm428, 1, 0
        %v493 = vsel %vm429, 1, 0
        %v494 = vsel %vm430, 1, 0
        %v495 = vsel %vm431, 1, 0
        %v496 = vsel %vm432, 1, 0
        %v497 = vsel %vm433, 1, 0
        %v498 = vsel %vm434, 1, 0
        %v499 = vsel %vm435, 1, 0
        %v500 = vsel %vm436, 1, 0
        %v501 = vsel %vm437, 1, 0
        %v502 = vsel %vm438, 1, 0
        %v503 = vsel %vm439, 1, 0
        %v504 = vsel %vm440, 1, 0
        %v505 = vsel %vm441, 1, 0
        %v506 = vsel %vm442, 1, 0
        %v507 = vsel %vm443, 1, 0
        %v508 = vsel %vm444, 1, 0
        %v509 = vsel %vm445, 1, 0
        %v510 = vsel %vm446, 1, 0
        %v511 = vsel %vm447, 1, 0
        %v512 = vsel %vm448, 1, 0
        %v513 = vsel %vm449, 1, 0
        %v514 = vsel %vm450, 1, 0
        %v515 = vsel %vm451, 1, 0
        %v516 = vsel %vm452, 1, 0
        %v517 = vsel %vm453, 1, 0
        %v518 = vsel %vm454, 1, 0
        %v519 = vsel %vm455, 1, 0
        %v520 = vsel %vm456, 1, 0
        %v521 = vsel %vm457, 1, 0
        %v522 = vsel %vm458, 1, 0
        %v523 = vsel %vm459, 1, 0
        %v524 = vsel %vm460, 1, 0
        %v525 = vsel %vm461, 1, 0
        %v526 = vsel %vm462, 1, 0
        %v527 = vsel %vm463, 1, 0
        %v528 = vsel %vm464, 1, 0
        %v529 = vsel %vm465, 1, 0
        %v530 = vsel %vm466, 1, 0
        %v531 = vsel %vm467, 1, 0
        %v532 = vsel %vm468, 1, 0
        %v533 = vsel %vm469, 1, 0
        %v534 = vsel %vm470, 1, 0
        %v535 = vsel %vm471, 1, 0
        %v536 = vsel %vm472, 1, 0
        %v537 = vsel %vm473, 1, 0
        %v538 = vsel %vm474, 1, 0
        %v539 = vsel %vm475, 1, 0
        %v540 = vsel %vm476, 1, 0
        %v541 = vsel %vm477, 1, 0
        %v542 = vsel %vm478, 1, 0
        %v543 = vsel %vm479, 1, 0
        %v544 = vsel %vm480, 1, 0
        %v545 = vcvt.s32.f32 %v481
        %v546 = vcvt.s32.f32 %v482
        %v547 = vcvt.s32.f32 %v483
        %v548 = vcvt.s32.f32 %v484
        %v549 = vcvt.s32.f32 %v485
        %v550 = vcvt.s32.f32 %v486
        %v551 = vcvt.s32.f32 %v487
        %v552 = vcvt.s32.f32 %v488
        %v553 = vcvt.s32.f32 %v489
        %v554 = vcvt.s32.f32 %v490
        %v555 = vcvt.s32.f32 %v491
        %v556 = vcvt.s32.f32 %v492
        %v557 = vcvt.s32.f32 %v493
        %v558 = vcvt.s32.f32 %v494
        %v559 = vcvt.s32.f32 %v495
        %v560 = vcvt.s32.f32 %v496
        %v561 = vcvt.s32.f32 %v497
        %v562 = vcvt.s32.f32 %v498
        %v563 = vcvt.s32.f32 %v499
        %v564 = vcvt.s32.f32 %v500
        %v565 = vcvt.s32.f32 %v501
        %v566 = vcvt.s32.f32 %v502
        %v567 = vcvt.s32.f32 %v503
        %v568 = vcvt.s32.f32 %v504
        %v569 = vcvt.s32.f32 %v505
        %v570 = vcvt.s32.f32 %v506
        %v571 = vcvt.s32.f32 %v507
        %v572 = vcvt.s32.f32 %v508
        %v573 = vcvt.s32.f32 %v509
        %v574 = vcvt.s32.f32 %v510
        %v575 = vcvt.s32.f32 %v511
        %v576 = vcvt.s32.f32 %v512
        %v577 = vcvt.s32.f32 %v513
        %v578 = vcvt.s32.f32 %v514
        %v579 = vcvt.s32.f32 %v515
        %v580 = vcvt.s32.f32 %v516
        %v581 = vcvt.s32.f32 %v517
        %v582 = vcvt.s32.f32 %v518
        %v583 = vcvt.s32.f32 %v519
        %v584 = vcvt.s32.f32 %v520
        %v585 = vcvt.s32.f32 %v521
        %v586 = vcvt.s32.f32 %v522
        %v587 = vcvt.s32.f32 %v523
        %v588 = vcvt.s32.f32 %v524
        %v589 = vcvt.s32.f32 %v525
        %v590 = vcvt.s32.f32 %v526
        %v591 = vcvt.s32.f32 %v527
        %v592 = vcvt.s32.f32 %v528
        %v593 = vcvt.s32.f32 %v529
        %v594 = vcvt.s32.f32 %v530
        %v595 = vcvt.s32.f32 %v531
        %v596 = vcvt.s32.f32 %v532
        %v597 = vcvt.s32.f32 %v533
        %v598 = vcvt.s32.f32 %v534
        %v599 = vcvt.s32.f32 %v535
        %v600 = vcvt.s32.f32 %v536
        %v601 = vcvt.s32.f32 %v537
        %v602 = vcvt.s32.f32 %v538
        %v603 = vcvt.s32.f32 %v539
        %v604 = vcvt.s32.f32 %v540
        %v605 = vcvt.s32.f32 %v541
        %v606 = vcvt.s32.f32 %v542
        %v607 = vcvt.s32.f32 %v543
        %v608 = vcvt.s32.f32 %v544
        %v609 = vpack.c.bf16 %v547, %v545
        %v610 = vpack.c.bf16 %v548, %v546
        %v611 = vpack.c.bf16 %v551, %v549
        %v612 = vpack.c.bf16 %v552, %v550
        %v613 = vpack.c.bf16 %v555, %v553
        %v614 = vpack.c.bf16 %v556, %v554
        %v615 = vpack.c.bf16 %v559, %v557
        %v616 = vpack.c.bf16 %v560, %v558
        %v617 = vpack.c.bf16 %v563, %v561
        %v618 = vpack.c.bf16 %v564, %v562
        %v619 = vpack.c.bf16 %v567, %v565
        %v620 = vpack.c.bf16 %v568, %v566
        %v621 = vpack.c.bf16 %v571, %v569
        %v622 = vpack.c.bf16 %v572, %v570
        %v623 = vpack.c.bf16 %v575, %v573
        %v624 = vpack.c.bf16 %v576, %v574
        %v625 = vpack.c.bf16 %v579, %v577
        %v626 = vpack.c.bf16 %v580, %v578
        %v627 = vpack.c.bf16 %v583, %v581
        %v628 = vpack.c.bf16 %v584, %v582
        %v629 = vpack.c.bf16 %v587, %v585
        %v630 = vpack.c.bf16 %v588, %v586
        %v631 = vpack.c.bf16 %v591, %v589
        %v632 = vpack.c.bf16 %v592, %v590
        %v633 = vpack.c.bf16 %v595, %v593
        %v634 = vpack.c.bf16 %v596, %v594
        %v635 = vpack.c.bf16 %v599, %v597
        %v636 = vpack.c.bf16 %v600, %v598
        %v637 = vpack.c.bf16 %v603, %v601
        %v638 = vpack.c.bf16 %v604, %v602
        %v639 = vpack.c.bf16 %v607, %v605
        %v640 = vpack.c.bf16 %v608, %v606
        %v673 = vunpack.c.l.b16 %v286
        %v674 = vunpack.c.l.b16 %v287
        %v675 = vunpack.c.l.b16 %v288
        %v676 = vunpack.c.l.b16 %v289
        %v677 = vunpack.c.l.b16 %v290
        %v678 = vunpack.c.l.b16 %v291
        %v679 = vunpack.c.l.b16 %v292
        %v680 = vunpack.c.l.b16 %v293
        %v681 = vunpack.c.l.b16 %v294
        %v682 = vunpack.c.l.b16 %v295
        %v683 = vunpack.c.l.b16 %v296
        %v684 = vunpack.c.l.b16 %v297
        %v685 = vunpack.c.l.b16 %v298
        %v686 = vunpack.c.l.b16 %v299
        %v687 = vunpack.c.l.b16 %v300
        %v688 = vunpack.c.l.b16 %v301
        %v689 = vunpack.c.l.b16 %v302
        %v690 = vunpack.c.l.b16 %v303
        %v691 = vunpack.c.l.b16 %v304
        %v692 = vunpack.c.l.b16 %v305
        %v693 = vunpack.c.l.b16 %v306
        %v694 = vunpack.c.l.b16 %v307
        %v695 = vunpack.c.l.b16 %v308
        %v696 = vunpack.c.l.b16 %v309
        %v697 = vunpack.c.l.b16 %v310
        %v698 = vunpack.c.l.b16 %v311
        %v699 = vunpack.c.l.b16 %v312
        %v700 = vunpack.c.l.b16 %v313
        %v701 = vunpack.c.l.b16 %v314
        %v702 = vunpack.c.l.b16 %v315
        %v703 = vunpack.c.l.b16 %v316
        %v704 = vunpack.c.l.b16 %v317
        %v705 = vpack.c.b16 %v674, %v673
        %v706 = vpack.c.b16 %v676, %v675
        %v707 = vpack.c.b16 %v678, %v677
        %v708 = vpack.c.b16 %v680, %v679
        %v709 = vpack.c.b16 %v682, %v681
        %v710 = vpack.c.b16 %v684, %v683
        %v711 = vpack.c.b16 %v686, %v685
        %v712 = vpack.c.b16 %v688, %v687
        %v713 = vpack.c.b16 %v690, %v689
        %v714 = vpack.c.b16 %v692, %v691
        %v715 = vpack.c.b16 %v694, %v693
        %v716 = vpack.c.b16 %v696, %v695
        %v717 = vpack.c.b16 %v698, %v697
        %v718 = vpack.c.b16 %v700, %v699
        %v719 = vpack.c.b16 %v702, %v701
        %v720 = vpack.c.b16 %v704, %v703
        %737 = vmatprep.subr.bf16.mxu0 0
        %738 = vmatpush1.bf16.msra.mxu0 %v705
        %739 = vmatprep.subr.bf16.mxu0 0
        %740 = vmatpush1.bf16.msra.mxu0 %v706
        %741 = vmatprep.subr.bf16.mxu0 0
        %742 = vmatpush1.bf16.msra.mxu0 %v707
        %743 = vmatprep.subr.bf16.mxu0 0
        %744 = vmatpush1.bf16.msra.mxu0 %v708
        %745 = vmatprep.subr.bf16.mxu0 0
        %746 = vmatpush1.bf16.msra.mxu0 %v709
        %747 = vmatprep.subr.bf16.mxu0 0
        %748 = vmatpush1.bf16.msra.mxu0 %v710
        %749 = vmatprep.subr.bf16.mxu0 0
        %750 = vmatpush1.bf16.msra.mxu0 %v711
        %751 = vmatprep.subr.bf16.mxu0 0
        %752 = vmatpush1.bf16.msra.mxu0 %v712
        %753 = vmatprep.subr.bf16.mxu0 0
        %754 = vmatpush1.bf16.msra.mxu0 %v713
        %755 = vmatprep.subr.bf16.mxu0 0
        %756 = vmatpush1.bf16.msra.mxu0 %v714
        %757 = vmatprep.subr.bf16.mxu0 0
        %758 = vmatpush1.bf16.msra.mxu0 %v715
        %759 = vmatprep.subr.bf16.mxu0 0
        %760 = vmatpush1.bf16.msra.mxu0 %v716
        %761 = vmatprep.subr.bf16.mxu0 0
        %762 = vmatpush1.bf16.msra.mxu0 %v717
        %763 = vmatprep.subr.bf16.mxu0 0
        %764 = vmatpush1.bf16.msra.mxu0 %v718
        %765 = vmatprep.subr.bf16.mxu0 0
        %766 = vmatpush1.bf16.msra.mxu0 %v719
        %767 = vmatprep.subr.bf16.mxu0 0
        %768 = vmatpush1.bf16.msra.mxu0 %v720
        %769 = vmatprep.mubr.bf16.mxu0 %v610
        %770 = vmatmul.mubr.bf16.gmra.mrb[0].mxu0 %v609
        %v771 = vpop.f32.mrb[0].mxu0
        %v772 = vadd.f32 0.0, %v771
        %v773 = vpop.f32.mrb[0].mxu0
        %v774 = vpop.f32.mrb[0].mxu0
        %v775 = vadd.f32 0.0, %v774
        %v776 = vpop.f32.mrb[0].mxu0
        %777 = vmatprep.mubr.bf16.mxu0 %v612
        %778 = vmatmul.mubr.bf16.gmra.mrb[0].mxu0 %v611
        %v779 = vpop.f32.mrb[0].mxu0
        %v780 = vadd.f32 0.0, %v779
        %v781 = vpop.f32.mrb[0].mxu0
        %v782 = vpop.f32.mrb[0].mxu0
        %v783 = vadd.f32 0.0, %v782
        %v784 = vpop.f32.mrb[0].mxu0
        %785 = vmatprep.mubr.bf16.mxu0 %v614
        %786 = vmatmul.mubr.bf16.gmra.mrb[0].mxu0 %v613
        %v787 = vpop.f32.mrb[0].mxu0
        %v788 = vadd.f32 0.0, %v787
        %v789 = vpop.f32.mrb[0].mxu0
        %v790 = vpop.f32.mrb[0].mxu0
        %v791 = vadd.f32 0.0, %v790
        %v792 = vpop.f32.mrb[0].mxu0
        %793 = vmatprep.mubr.bf16.mxu0 %v616
        %794 = vmatmul.mubr.bf16.gmra.mrb[0].mxu0 %v615
        %v795 = vpop.f32.mrb[0].mxu0
        %v796 = vadd.f32 0.0, %v795
        %v797 = vpop.f32.mrb[0].mxu0
        %v798 = vpop.f32.mrb[0].mxu0
        %v799 = vadd.f32 0.0, %v798
        %v800 = vpop.f32.mrb[0].mxu0
        %801 = vmatprep.mubr.bf16.mxu0 %v618
        %802 = vmatmul.mubr.bf16.gmra.mrb[0].mxu0 %v617
        %v803 = vpop.f32.mrb[0].mxu0
        %v804 = vadd.f32 0.0, %v803
        %v805 = vpop.f32.mrb[0].mxu0
        %v806 = vpop.f32.mrb[0].mxu0
        %v807 = vadd.f32 0.0, %v806
        %v808 = vpop.f32.mrb[0].mxu0
        %809 = vmatprep.mubr.bf16.mxu0 %v620
        %810 = vmatmul.mubr.bf16.gmra.mrb[0].mxu0 %v619
        %v811 = vpop.f32.mrb[0].mxu0
        %v812 = vadd.f32 0.0, %v811
        %v813 = vpop.f32.mrb[0].mxu0
        %v814 = vpop.f32.mrb[0].mxu0
        %v815 = vadd.f32 0.0, %v814
        %v816 = vpop.f32.mrb[0].mxu0
        %817 = vmatprep.mubr.bf16.mxu0 %v622
        %818 = vmatmul.mubr.bf16.gmra.mrb[0].mxu0 %v621
        %v819 = vpop.f32.mrb[0].mxu0
        %v820 = vadd.f32 0.0, %v819
        %v821 = vpop.f32.mrb[0].mxu0
        %v822 = vpop.f32.mrb[0].mxu0
        %v823 = vadd.f32 0.0, %v822
        %v824 = vpop.f32.mrb[0].mxu0
        %825 = vmatprep.mubr.bf16.mxu0 %v624
        %826 = vmatmul.mubr.bf16.gmra.mrb[0].mxu0 %v623
        %v827 = vpop.f32.mrb[0].mxu0
        %v828 = vadd.f32 0.0, %v827
        %v829 = vpop.f32.mrb[0].mxu0
        %v830 = vpop.f32.mrb[0].mxu0
        %v831 = vadd.f32 0.0, %v830
        %v832 = vpop.f32.mrb[0].mxu0
        %833 = vmatprep.mubr.bf16.mxu0 %v626
        %834 = vmatmul.mubr.bf16.gmra.mrb[0].mxu0 %v625
        %v835 = vpop.f32.mrb[0].mxu0
        %v836 = vadd.f32 0.0, %v835
        %v837 = vpop.f32.mrb[0].mxu0
        %v838 = vpop.f32.mrb[0].mxu0
        %v839 = vadd.f32 0.0, %v838
        %v840 = vpop.f32.mrb[0].mxu0
        %841 = vmatprep.mubr.bf16.mxu0 %v628
        %842 = vmatmul.mubr.bf16.gmra.mrb[0].mxu0 %v627
        %v843 = vpop.f32.mrb[0].mxu0
        %v844 = vadd.f32 0.0, %v843
        %v845 = vpop.f32.mrb[0].mxu0
        %v846 = vpop.f32.mrb[0].mxu0
        %v847 = vadd.f32 0.0, %v846
        %v848 = vpop.f32.mrb[0].mxu0
        %849 = vmatprep.mubr.bf16.mxu0 %v630
        %850 = vmatmul.mubr.bf16.gmra.mrb[0].mxu0 %v629
        %v851 = vpop.f32.mrb[0].mxu0
        %v852 = vadd.f32 0.0, %v851
        %v853 = vpop.f32.mrb[0].mxu0
        %v854 = vpop.f32.mrb[0].mxu0
        %v855 = vadd.f32 0.0, %v854
        %v856 = vpop.f32.mrb[0].mxu0
        %857 = vmatprep.mubr.bf16.mxu0 %v632
        %858 = vmatmul.mubr.bf16.gmra.mrb[0].mxu0 %v631
        %v859 = vpop.f32.mrb[0].mxu0
        %v860 = vadd.f32 0.0, %v859
        %v861 = vpop.f32.mrb[0].mxu0
        %v862 = vpop.f32.mrb[0].mxu0
        %v863 = vadd.f32 0.0, %v862
        %v864 = vpop.f32.mrb[0].mxu0
        %865 = vmatprep.mubr.bf16.mxu0 %v634
        %866 = vmatmul.mubr.bf16.gmra.mrb[0].mxu0 %v633
        %v867 = vpop.f32.mrb[0].mxu0
        %v868 = vadd.f32 0.0, %v867
        %v869 = vpop.f32.mrb[0].mxu0
        %v870 = vpop.f32.mrb[0].mxu0
        %v871 = vadd.f32 0.0, %v870
        %v872 = vpop.f32.mrb[0].mxu0
        %873 = vmatprep.mubr.bf16.mxu0 %v636
        %874 = vmatmul.mubr.bf16.gmra.mrb[0].mxu0 %v635
        %v875 = vpop.f32.mrb[0].mxu0
        %v876 = vadd.f32 0.0, %v875
        %v877 = vpop.f32.mrb[0].mxu0
        %v878 = vpop.f32.mrb[0].mxu0
        %v879 = vadd.f32 0.0, %v878
        %v880 = vpop.f32.mrb[0].mxu0
        %881 = vmatprep.mubr.bf16.mxu0 %v638
        %882 = vmatmul.mubr.bf16.gmra.mrb[0].mxu0 %v637
        %v883 = vpop.f32.mrb[0].mxu0
        %v884 = vadd.f32 0.0, %v883
        %v885 = vpop.f32.mrb[0].mxu0
        %v886 = vpop.f32.mrb[0].mxu0
        %v887 = vadd.f32 0.0, %v886
        %v888 = vpop.f32.mrb[0].mxu0
        %889 = vmatprep.mubr.bf16.mxu0 %v640
        %890 = vmatmul.mubr.bf16.gmra.mrb[0].mxu0 %v639
        %v891 = vpop.f32.mrb[0].mxu0
        %v892 = vadd.f32 0.0, %v891
        %v893 = vpop.f32.mrb[0].mxu0
        %v894 = vpop.f32.mrb[0].mxu0
        %v895 = vadd.f32 0.0, %v894
        %v896 = vpop.f32.mrb[0].mxu0
        %897 = vdwg.mxu0
        %v898 = vld [vmem:[%s2] sm:$0xff]
        %v899 = vld [vmem:[%s2 + $0x8] sm:$0xff]
        %v900 = vld [vmem:[%s2 + $0x10] sm:$0xff]
        %v901 = vld [vmem:[%s2 + $0x18] sm:$0xff]
        %v902 = vld [vmem:[%s2 + $0x20] sm:$0xff]
        %v903 = vld [vmem:[%s2 + $0x28] sm:$0xff]
        %v904 = vld [vmem:[%s2 + $0x30] sm:$0xff]
        %v905 = vld [vmem:[%s2 + $0x38] sm:$0xff]
        %v906 = vpack.c.bf16 %v775, %v772
        %v907 = vpack.c.bf16 %v783, %v780
        %v908 = vpack.c.bf16 %v791, %v788
        %v909 = vpack.c.bf16 %v799, %v796
        %v910 = vpack.c.bf16 %v807, %v804
        %v911 = vpack.c.bf16 %v815, %v812
        %v912 = vpack.c.bf16 %v823, %v820
        %v913 = vpack.c.bf16 %v831, %v828
        %v914 = vpack.c.bf16 %v839, %v836
        %v915 = vpack.c.bf16 %v847, %v844
        %v916 = vpack.c.bf16 %v855, %v852
        %v917 = vpack.c.bf16 %v863, %v860
        %v918 = vpack.c.bf16 %v871, %v868
        %v919 = vpack.c.bf16 %v879, %v876
        %v920 = vpack.c.bf16 %v887, %v884
        %v921 = vpack.c.bf16 %v895, %v892
        %922 = vset.pattern.permute.xlu0 1
        %923 = vperm.xlu0 %922, %v254
        %v924 = vpop.permute.xlu0 %923
        %925 = vset.pattern.permute.xlu0 1
        %926 = vperm.xlu0 %925, %v255
        %v927 = vpop.permute.xlu0 %926
        %928 = vset.pattern.permute.xlu0 1
        %929 = vperm.xlu0 %928, %v256
        %v930 = vpop.permute.xlu0 %929
        %931 = vset.pattern.permute.xlu0 1
        %932 = vperm.xlu0 %931, %v257
        %v933 = vpop.permute.xlu0 %932
        %934 = vset.pattern.permute.xlu0 1
        %935 = vperm.xlu0 %934, %v258
        %v936 = vpop.permute.xlu0 %935
        %937 = vset.pattern.permute.xlu0 1
        %938 = vperm.xlu0 %937, %v259
        %v939 = vpop.permute.xlu0 %938
        %940 = vset.pattern.permute.xlu0 1
        %941 = vperm.xlu0 %940, %v260
        %v942 = vpop.permute.xlu0 %941
        %943 = vset.pattern.permute.xlu0 1
        %944 = vperm.xlu0 %943, %v261
        %v945 = vpop.permute.xlu0 %944
        %946 = vset.pattern.permute.xlu0 1
        %947 = vperm.xlu0 %946, %v262
        %v948 = vpop.permute.xlu0 %947
        %949 = vset.pattern.permute.xlu0 1
        %950 = vperm.xlu0 %949, %v263
        %v951 = vpop.permute.xlu0 %950
        %952 = vset.pattern.permute.xlu0 1
        %953 = vperm.xlu0 %952, %v264
        %v954 = vpop.permute.xlu0 %953
        %955 = vset.pattern.permute.xlu0 1
        %956 = vperm.xlu0 %955, %v265
        %v957 = vpop.permute.xlu0 %956
        %958 = vset.pattern.permute.xlu0 1
        %959 = vperm.xlu0 %958, %v266
        %v960 = vpop.permute.xlu0 %959
        %961 = vset.pattern.permute.xlu0 1
        %962 = vperm.xlu0 %961, %v267
        %v963 = vpop.permute.xlu0 %962
        %964 = vset.pattern.permute.xlu0 1
        %965 = vperm.xlu0 %964, %v268
        %v966 = vpop.permute.xlu0 %965
        %967 = vset.pattern.permute.xlu0 1
        %968 = vperm.xlu0 %967, %v269
        %v969 = vpop.permute.xlu0 %968
        %970 = vset.pattern.permute.xlu0 1
        %971 = vperm.xlu0 %970, %v270
        %v972 = vpop.permute.xlu0 %971
        %973 = vset.pattern.permute.xlu0 1
        %974 = vperm.xlu0 %973, %v271
        %v975 = vpop.permute.xlu0 %974
        %976 = vset.pattern.permute.xlu0 1
        %977 = vperm.xlu0 %976, %v272
        %v978 = vpop.permute.xlu0 %977
        %979 = vset.pattern.permute.xlu0 1
        %980 = vperm.xlu0 %979, %v273
        %v981 = vpop.permute.xlu0 %980
        %982 = vset.pattern.permute.xlu0 1
        %983 = vperm.xlu0 %982, %v274
        %v984 = vpop.permute.xlu0 %983
        %985 = vset.pattern.permute.xlu0 1
        %986 = vperm.xlu0 %985, %v275
        %v987 = vpop.permute.xlu0 %986
        %988 = vset.pattern.permute.xlu0 1
        %989 = vperm.xlu0 %988, %v276
        %v990 = vpop.permute.xlu0 %989
        %991 = vset.pattern.permute.xlu0 1
        %992 = vperm.xlu0 %991, %v277
        %v993 = vpop.permute.xlu0 %992
        %994 = vset.pattern.permute.xlu0 1
        %995 = vperm.xlu0 %994, %v278
        %v996 = vpop.permute.xlu0 %995
        %997 = vset.pattern.permute.xlu0 1
        %998 = vperm.xlu0 %997, %v279
        %v999 = vpop.permute.xlu0 %998
        %1000 = vset.pattern.permute.xlu0 1
        %1001 = vperm.xlu0 %1000, %v280
        %v1002 = vpop.permute.xlu0 %1001
        %1003 = vset.pattern.permute.xlu0 1
        %1004 = vperm.xlu0 %1003, %v281
        %v1005 = vpop.permute.xlu0 %1004
        %1006 = vset.pattern.permute.xlu0 1
        %1007 = vperm.xlu0 %1006, %v282
        %v1008 = vpop.permute.xlu0 %1007
        %1009 = vset.pattern.permute.xlu0 1
        %1010 = vperm.xlu0 %1009, %v283
        %v1011 = vpop.permute.xlu0 %1010
        %1012 = vset.pattern.permute.xlu0 1
        %1013 = vperm.xlu0 %1012, %v284
        %v1014 = vpop.permute.xlu0 %1013
        %1015 = vset.pattern.permute.xlu0 1
        %1016 = vperm.xlu0 %1015, %v285
        %v1017 = vpop.permute.xlu0 %1016
        %vm1018 = vcmp.eq.s32.totalorder %v924, %v319
        %vm1019 = vcmp.eq.s32.totalorder %v924, %v320
        %vm1020 = vcmp.eq.s32.totalorder %v927, %v319
        %vm1021 = vcmp.eq.s32.totalorder %v927, %v320
        %vm1022 = vcmp.eq.s32.totalorder %v930, %v319
        %vm1023 = vcmp.eq.s32.totalorder %v930, %v320
        %vm1024 = vcmp.eq.s32.totalorder %v933, %v319
        %vm1025 = vcmp.eq.s32.totalorder %v933, %v320
        %vm1026 = vcmp.eq.s32.totalorder %v936, %v319
        %vm1027 = vcmp.eq.s32.totalorder %v936, %v320
        %vm1028 = vcmp.eq.s32.totalorder %v939, %v319
        %vm1029 = vcmp.eq.s32.totalorder %v939, %v320
        %vm1030 = vcmp.eq.s32.totalorder %v942, %v319
        %vm1031 = vcmp.eq.s32.totalorder %v942, %v320
        %vm1032 = vcmp.eq.s32.totalorder %v945, %v319
        %vm1033 = vcmp.eq.s32.totalorder %v945, %v320
        %vm1034 = vcmp.eq.s32.totalorder %v948, %v319
        %vm1035 = vcmp.eq.s32.totalorder %v948, %v320
        %vm1036 = vcmp.eq.s32.totalorder %v951, %v319
        %vm1037 = vcmp.eq.s32.totalorder %v951, %v320
        %vm1038 = vcmp.eq.s32.totalorder %v954, %v319
        %vm1039 = vcmp.eq.s32.totalorder %v954, %v320
        %vm1040 = vcmp.eq.s32.totalorder %v957, %v319
        %vm1041 = vcmp.eq.s32.totalorder %v957, %v320
        %vm1042 = vcmp.eq.s32.totalorder %v960, %v319
        %vm1043 = vcmp.eq.s32.totalorder %v960, %v320
        %vm1044 = vcmp.eq.s32.totalorder %v963, %v319
        %vm1045 = vcmp.eq.s32.totalorder %v963, %v320
        %vm1046 = vcmp.eq.s32.totalorder %v966, %v319
        %vm1047 = vcmp.eq.s32.totalorder %v966, %v320
        %vm1048 = vcmp.eq.s32.totalorder %v969, %v319
        %vm1049 = vcmp.eq.s32.totalorder %v969, %v320
        %vm1050 = vcmp.eq.s32.totalorder %v972, %v319
        %vm1051 = vcmp.eq.s32.totalorder %v972, %v320
        %vm1052 = vcmp.eq.s32.totalorder %v975, %v319
        %vm1053 = vcmp.eq.s32.totalorder %v975, %v320
        %vm1054 = vcmp.eq.s32.totalorder %v978, %v319
        %vm1055 = vcmp.eq.s32.totalorder %v978, %v320
        %vm1056 = vcmp.eq.s32.totalorder %v981, %v319
        %vm1057 = vcmp.eq.s32.totalorder %v981, %v320
        %vm1058 = vcmp.eq.s32.totalorder %v984, %v319
        %vm1059 = vcmp.eq.s32.totalorder %v984, %v320
        %vm1060 = vcmp.eq.s32.totalorder %v987, %v319
        %vm1061 = vcmp.eq.s32.totalorder %v987, %v320
        %vm1062 = vcmp.eq.s32.totalorder %v990, %v319
        %vm1063 = vcmp.eq.s32.totalorder %v990, %v320
        %vm1064 = vcmp.eq.s32.totalorder %v993, %v319
        %vm1065 = vcmp.eq.s32.totalorder %v993, %v320
        %vm1066 = vcmp.eq.s32.totalorder %v996, %v319
        %vm1067 = vcmp.eq.s32.totalorder %v996, %v320
        %vm1068 = vcmp.eq.s32.totalorder %v999, %v319
        %vm1069 = vcmp.eq.s32.totalorder %v999, %v320
        %vm1070 = vcmp.eq.s32.totalorder %v1002, %v319
        %vm1071 = vcmp.eq.s32.totalorder %v1002, %v320
        %vm1072 = vcmp.eq.s32.totalorder %v1005, %v319
        %vm1073 = vcmp.eq.s32.totalorder %v1005, %v320
        %vm1074 = vcmp.eq.s32.totalorder %v1008, %v319
        %vm1075 = vcmp.eq.s32.totalorder %v1008, %v320
        %vm1076 = vcmp.eq.s32.totalorder %v1011, %v319
        %vm1077 = vcmp.eq.s32.totalorder %v1011, %v320
        %vm1078 = vcmp.eq.s32.totalorder %v1014, %v319
        %vm1079 = vcmp.eq.s32.totalorder %v1014, %v320
        %vm1080 = vcmp.eq.s32.totalorder %v1017, %v319
        %vm1081 = vcmp.eq.s32.totalorder %v1017, %v320
        %v1082 = vsel %vm1018, 1, 0
        %v1083 = vsel %vm1019, 1, 0
        %v1084 = vsel %vm1020, 1, 0
        %v1085 = vsel %vm1021, 1, 0
        %v1086 = vsel %vm1022, 1, 0
        %v1087 = vsel %vm1023, 1, 0
        %v1088 = vsel %vm1024, 1, 0
        %v1089 = vsel %vm1025, 1, 0
        %v1090 = vsel %vm1026, 1, 0
        %v1091 = vsel %vm1027, 1, 0
        %v1092 = vsel %vm1028, 1, 0
        %v1093 = vsel %vm1029, 1, 0
        %v1094 = vsel %vm1030, 1, 0
        %v1095 = vsel %vm1031, 1, 0
        %v1096 = vsel %vm1032, 1, 0
        %v1097 = vsel %vm1033, 1, 0
        %v1098 = vsel %vm1034, 1, 0
        %v1099 = vsel %vm1035, 1, 0
        %v1100 = vsel %vm1036, 1, 0
        %v1101 = vsel %vm1037, 1, 0
        %v1102 = vsel %vm1038, 1, 0
        %v1103 = vsel %vm1039, 1, 0
        %v1104 = vsel %vm1040, 1, 0
        %v1105 = vsel %vm1041, 1, 0
        %v1106 = vsel %vm1042, 1, 0
        %v1107 = vsel %vm1043, 1, 0
        %v1108 = vsel %vm1044, 1, 0
        %v1109 = vsel %vm1045, 1, 0
        %v1110 = vsel %vm1046, 1, 0
        %v1111 = vsel %vm1047, 1, 0
        %v1112 = vsel %vm1048, 1, 0
        %v1113 = vsel %vm1049, 1, 0
        %v1114 = vsel %vm1050, 1, 0
        %v1115 = vsel %vm1051, 1, 0
        %v1116 = vsel %vm1052, 1, 0
        %v1117 = vsel %vm1053, 1, 0
        %v1118 = vsel %vm1054, 1, 0
        %v1119 = vsel %vm1055, 1, 0
        %v1120 = vsel %vm1056, 1, 0
        %v1121 = vsel %vm1057, 1, 0
        %v1122 = vsel %vm1058, 1, 0
        %v1123 = vsel %vm1059, 1, 0
        %v1124 = vsel %vm1060, 1, 0
        %v1125 = vsel %vm1061, 1, 0
        %v1126 = vsel %vm1062, 1, 0
        %v1127 = vsel %vm1063, 1, 0
        %v1128 = vsel %vm1064, 1, 0
        %v1129 = vsel %vm1065, 1, 0
        %v1130 = vsel %vm1066, 1, 0
        %v1131 = vsel %vm1067, 1, 0
        %v1132 = vsel %vm1068, 1, 0
        %v1133 = vsel %vm1069, 1, 0
        %v1134 = vsel %vm1070, 1, 0
        %v1135 = vsel %vm1071, 1, 0
        %v1136 = vsel %vm1072, 1, 0
        %v1137 = vsel %vm1073, 1, 0
        %v1138 = vsel %vm1074, 1, 0
        %v1139 = vsel %vm1075, 1, 0
        %v1140 = vsel %vm1076, 1, 0
        %v1141 = vsel %vm1077, 1, 0
        %v1142 = vsel %vm1078, 1, 0
        %v1143 = vsel %vm1079, 1, 0
        %v1144 = vsel %vm1080, 1, 0
        %v1145 = vsel %vm1081, 1, 0
        %v1146 = vcvt.s32.f32 %v1082
        %v1147 = vcvt.s32.f32 %v1083
        %v1148 = vcvt.s32.f32 %v1084
        %v1149 = vcvt.s32.f32 %v1085
        %v1150 = vcvt.s32.f32 %v1086
        %v1151 = vcvt.s32.f32 %v1087
        %v1152 = vcvt.s32.f32 %v1088
        %v1153 = vcvt.s32.f32 %v1089
        %v1154 = vcvt.s32.f32 %v1090
        %v1155 = vcvt.s32.f32 %v1091
        %v1156 = vcvt.s32.f32 %v1092
        %v1157 = vcvt.s32.f32 %v1093
        %v1158 = vcvt.s32.f32 %v1094
        %v1159 = vcvt.s32.f32 %v1095
        %v1160 = vcvt.s32.f32 %v1096
        %v1161 = vcvt.s32.f32 %v1097
        %v1162 = vcvt.s32.f32 %v1098
        %v1163 = vcvt.s32.f32 %v1099
        %v1164 = vcvt.s32.f32 %v1100
        %v1165 = vcvt.s32.f32 %v1101
        %v1166 = vcvt.s32.f32 %v1102
        %v1167 = vcvt.s32.f32 %v1103
        %v1168 = vcvt.s32.f32 %v1104
        %v1169 = vcvt.s32.f32 %v1105
        %v1170 = vcvt.s32.f32 %v1106
        %v1171 = vcvt.s32.f32 %v1107
        %v1172 = vcvt.s32.f32 %v1108
        %v1173 = vcvt.s32.f32 %v1109
        %v1174 = vcvt.s32.f32 %v1110
        %v1175 = vcvt.s32.f32 %v1111
        %v1176 = vcvt.s32.f32 %v1112
        %v1177 = vcvt.s32.f32 %v1113
        %v1178 = vcvt.s32.f32 %v1114
        %v1179 = vcvt.s32.f32 %v1115
        %v1180 = vcvt.s32.f32 %v1116
        %v1181 = vcvt.s32.f32 %v1117
        %v1182 = vcvt.s32.f32 %v1118
        %v1183 = vcvt.s32.f32 %v1119
        %v1184 = vcvt.s32.f32 %v1120
        %v1185 = vcvt.s32.f32 %v1121
        %v1186 = vcvt.s32.f32 %v1122
        %v1187 = vcvt.s32.f32 %v1123
        %v1188 = vcvt.s32.f32 %v1124
        %v1189 = vcvt.s32.f32 %v1125
        %v1190 = vcvt.s32.f32 %v1126
        %v1191 = vcvt.s32.f32 %v1127
        %v1192 = vcvt.s32.f32 %v1128
        %v1193 = vcvt.s32.f32 %v1129
        %v1194 = vcvt.s32.f32 %v1130
        %v1195 = vcvt.s32.f32 %v1131
        %v1196 = vcvt.s32.f32 %v1132
        %v1197 = vcvt.s32.f32 %v1133
        %v1198 = vcvt.s32.f32 %v1134
        %v1199 = vcvt.s32.f32 %v1135
        %v1200 = vcvt.s32.f32 %v1136
        %v1201 = vcvt.s32.f32 %v1137
        %v1202 = vcvt.s32.f32 %v1138
        %v1203 = vcvt.s32.f32 %v1139
        %v1204 = vcvt.s32.f32 %v1140
        %v1205 = vcvt.s32.f32 %v1141
        %v1206 = vcvt.s32.f32 %v1142
        %v1207 = vcvt.s32.f32 %v1143
        %v1208 = vcvt.s32.f32 %v1144
        %v1209 = vcvt.s32.f32 %v1145
        %v1210 = vpack.c.bf16 %v1148, %v1146
        %v1211 = vpack.c.bf16 %v1149, %v1147
        %v1212 = vpack.c.bf16 %v1152, %v1150
        %v1213 = vpack.c.bf16 %v1153, %v1151
        %v1214 = vpack.c.bf16 %v1156, %v1154
        %v1215 = vpack.c.bf16 %v1157, %v1155
        %v1216 = vpack.c.bf16 %v1160, %v1158
        %v1217 = vpack.c.bf16 %v1161, %v1159
        %v1218 = vpack.c.bf16 %v1164, %v1162
        %v1219 = vpack.c.bf16 %v1165, %v1163
        %v1220 = vpack.c.bf16 %v1168, %v1166
        %v1221 = vpack.c.bf16 %v1169, %v1167
        %v1222 = vpack.c.bf16 %v1172, %v1170
        %v1223 = vpack.c.bf16 %v1173, %v1171
        %v1224 = vpack.c.bf16 %v1176, %v1174
        %v1225 = vpack.c.bf16 %v1177, %v1175
        %v1226 = vpack.c.bf16 %v1180, %v1178
        %v1227 = vpack.c.bf16 %v1181, %v1179
        %v1228 = vpack.c.bf16 %v1184, %v1182
        %v1229 = vpack.c.bf16 %v1185, %v1183
        %v1230 = vpack.c.bf16 %v1188, %v1186
        %v1231 = vpack.c.bf16 %v1189, %v1187
        %v1232 = vpack.c.bf16 %v1192, %v1190
        %v1233 = vpack.c.bf16 %v1193, %v1191
        %v1234 = vpack.c.bf16 %v1196, %v1194
        %v1235 = vpack.c.bf16 %v1197, %v1195
        %v1236 = vpack.c.bf16 %v1200, %v1198
        %v1237 = vpack.c.bf16 %v1201, %v1199
        %v1238 = vpack.c.bf16 %v1204, %v1202
        %v1239 = vpack.c.bf16 %v1205, %v1203
        %v1240 = vpack.c.bf16 %v1208, %v1206
        %v1241 = vpack.c.bf16 %v1209, %v1207
        %1242 = vmatprep.subr.bf16.mxu0 0
        %1243 = vmatpush1.bf16.msra.mxu0 %v705
        %1244 = vmatprep.subr.bf16.mxu0 0
        %1245 = vmatpush1.bf16.msra.mxu0 %v706
        %1246 = vmatprep.subr.bf16.mxu0 0
        %1247 = vmatpush1.bf16.msra.mxu0 %v707
        %1248 = vmatprep.subr.bf16.mxu0 0
        %1249 = vmatpush1.bf16.msra.mxu0 %v708
        %1250 = vmatprep.subr.bf16.mxu0 0
        %1251 = vmatpush1.bf16.msra.mxu0 %v709
        %1252 = vmatprep.subr.bf16.mxu0 0
        %1253 = vmatpush1.bf16.msra.mxu0 %v710
        %1254 = vmatprep.subr.bf16.mxu0 0
        %1255 = vmatpush1.bf16.msra.mxu0 %v711
        %1256 = vmatprep.subr.bf16.mxu0 0
        %1257 = vmatpush1.bf16.msra.mxu0 %v712
        %1258 = vmatprep.subr.bf16.mxu0 0
        %1259 = vmatpush1.bf16.msra.mxu0 %v713
        %1260 = vmatprep.subr.bf16.mxu0 0
        %1261 = vmatpush1.bf16.msra.mxu0 %v714
        %1262 = vmatprep.subr.bf16.mxu0 0
        %1263 = vmatpush1.bf16.msra.mxu0 %v715
        %1264 = vmatprep.subr.bf16.mxu0 0
        %1265 = vmatpush1.bf16.msra.mxu0 %v716
        %1266 = vmatprep.subr.bf16.mxu0 0
        %1267 = vmatpush1.bf16.msra.mxu0 %v717
        %1268 = vmatprep.subr.bf16.mxu0 0
        %1269 = vmatpush1.bf16.msra.mxu0 %v718
        %1270 = vmatprep.subr.bf16.mxu0 0
        %1271 = vmatpush1.bf16.msra.mxu0 %v719
        %1272 = vmatprep.subr.bf16.mxu0 0
        %1273 = vmatpush1.bf16.msra.mxu0 %v720
        %1274 = vmatprep.mubr.bf16.mxu0 %v1211
        %1275 = vmatmul.mubr.bf16.gmra.mrb[0].mxu0 %v1210
        %v1276 = vpop.f32.mrb[0].mxu0
        %v1277 = vadd.f32 0.0, %v1276
        %v1278 = vpop.f32.mrb[0].mxu0
        %v1279 = vpop.f32.mrb[0].mxu0
        %v1280 = vadd.f32 0.0, %v1279
        %v1281 = vpop.f32.mrb[0].mxu0
        %1282 = vmatprep.mubr.bf16.mxu0 %v1213
        %1283 = vmatmul.mubr.bf16.gmra.mrb[0].mxu0 %v1212
        %v1284 = vpop.f32.mrb[0].mxu0
        %v1285 = vadd.f32 0.0, %v1284
        %v1286 = vpop.f32.mrb[0].mxu0
        %v1287 = vpop.f32.mrb[0].mxu0
        %v1288 = vadd.f32 0.0, %v1287
        %v1289 = vpop.f32.mrb[0].mxu0
        %1290 = vmatprep.mubr.bf16.mxu0 %v1215
        %1291 = vmatmul.mubr.bf16.gmra.mrb[0].mxu0 %v1214
        %v1292 = vpop.f32.mrb[0].mxu0
        %v1293 = vadd.f32 0.0, %v1292
        %v1294 = vpop.f32.mrb[0].mxu0
        %v1295 = vpop.f32.mrb[0].mxu0
        %v1296 = vadd.f32 0.0, %v1295
        %v1297 = vpop.f32.mrb[0].mxu0
        %1298 = vmatprep.mubr.bf16.mxu0 %v1217
        %1299 = vmatmul.mubr.bf16.gmra.mrb[0].mxu0 %v1216
        %v1300 = vpop.f32.mrb[0].mxu0
        %v1301 = vadd.f32 0.0, %v1300
        %v1302 = vpop.f32.mrb[0].mxu0
        %v1303 = vpop.f32.mrb[0].mxu0
        %v1304 = vadd.f32 0.0, %v1303
        %v1305 = vpop.f32.mrb[0].mxu0
        %1306 = vmatprep.mubr.bf16.mxu0 %v1219
        %1307 = vmatmul.mubr.bf16.gmra.mrb[0].mxu0 %v1218
        %v1308 = vpop.f32.mrb[0].mxu0
        %v1309 = vadd.f32 0.0, %v1308
        %v1310 = vpop.f32.mrb[0].mxu0
        %v1311 = vpop.f32.mrb[0].mxu0
        %v1312 = vadd.f32 0.0, %v1311
        %v1313 = vpop.f32.mrb[0].mxu0
        %1314 = vmatprep.mubr.bf16.mxu0 %v1221
        %1315 = vmatmul.mubr.bf16.gmra.mrb[0].mxu0 %v1220
        %v1316 = vpop.f32.mrb[0].mxu0
        %v1317 = vadd.f32 0.0, %v1316
        %v1318 = vpop.f32.mrb[0].mxu0
        %v1319 = vpop.f32.mrb[0].mxu0
        %v1320 = vadd.f32 0.0, %v1319
        %v1321 = vpop.f32.mrb[0].mxu0
        %1322 = vmatprep.mubr.bf16.mxu0 %v1223
        %1323 = vmatmul.mubr.bf16.gmra.mrb[0].mxu0 %v1222
        %v1324 = vpop.f32.mrb[0].mxu0
        %v1325 = vadd.f32 0.0, %v1324
        %v1326 = vpop.f32.mrb[0].mxu0
        %v1327 = vpop.f32.mrb[0].mxu0
        %v1328 = vadd.f32 0.0, %v1327
        %v1329 = vpop.f32.mrb[0].mxu0
        %1330 = vmatprep.mubr.bf16.mxu0 %v1225
        %1331 = vmatmul.mubr.bf16.gmra.mrb[0].mxu0 %v1224
        %v1332 = vpop.f32.mrb[0].mxu0
        %v1333 = vadd.f32 0.0, %v1332
        %v1334 = vpop.f32.mrb[0].mxu0
        %v1335 = vpop.f32.mrb[0].mxu0
        %v1336 = vadd.f32 0.0, %v1335
        %v1337 = vpop.f32.mrb[0].mxu0
        %1338 = vmatprep.mubr.bf16.mxu0 %v1227
        %1339 = vmatmul.mubr.bf16.gmra.mrb[0].mxu0 %v1226
        %v1340 = vpop.f32.mrb[0].mxu0
        %v1341 = vadd.f32 0.0, %v1340
        %v1342 = vpop.f32.mrb[0].mxu0
        %v1343 = vpop.f32.mrb[0].mxu0
        %v1344 = vadd.f32 0.0, %v1343
        %v1345 = vpop.f32.mrb[0].mxu0
        %1346 = vmatprep.mubr.bf16.mxu0 %v1229
        %1347 = vmatmul.mubr.bf16.gmra.mrb[0].mxu0 %v1228
        %v1348 = vpop.f32.mrb[0].mxu0
        %v1349 = vadd.f32 0.0, %v1348
        %v1350 = vpop.f32.mrb[0].mxu0
        %v1351 = vpop.f32.mrb[0].mxu0
        %v1352 = vadd.f32 0.0, %v1351
        %v1353 = vpop.f32.mrb[0].mxu0
        %1354 = vmatprep.mubr.bf16.mxu0 %v1231
        %1355 = vmatmul.mubr.bf16.gmra.mrb[0].mxu0 %v1230
        %v1356 = vpop.f32.mrb[0].mxu0
        %v1357 = vadd.f32 0.0, %v1356
        %v1358 = vpop.f32.mrb[0].mxu0
        %v1359 = vpop.f32.mrb[0].mxu0
        %v1360 = vadd.f32 0.0, %v1359
        %v1361 = vpop.f32.mrb[0].mxu0
        %1362 = vmatprep.mubr.bf16.mxu0 %v1233
        %1363 = vmatmul.mubr.bf16.gmra.mrb[0].mxu0 %v1232
        %v1364 = vpop.f32.mrb[0].mxu0
        %v1365 = vadd.f32 0.0, %v1364
        %v1366 = vpop.f32.mrb[0].mxu0
        %v1367 = vpop.f32.mrb[0].mxu0
        %v1368 = vadd.f32 0.0, %v1367
        %v1369 = vpop.f32.mrb[0].mxu0
        %1370 = vmatprep.mubr.bf16.mxu0 %v1235
        %1371 = vmatmul.mubr.bf16.gmra.mrb[0].mxu0 %v1234
        %v1372 = vpop.f32.mrb[0].mxu0
        %v1373 = vadd.f32 0.0, %v1372
        %v1374 = vpop.f32.mrb[0].mxu0
        %v1375 = vpop.f32.mrb[0].mxu0
        %v1376 = vadd.f32 0.0, %v1375
        %v1377 = vpop.f32.mrb[0].mxu0
        %1378 = vmatprep.mubr.bf16.mxu0 %v1237
        %1379 = vmatmul.mubr.bf16.gmra.mrb[0].mxu0 %v1236
        %v1380 = vpop.f32.mrb[0].mxu0
        %v1381 = vadd.f32 0.0, %v1380
        %v1382 = vpop.f32.mrb[0].mxu0
        %v1383 = vpop.f32.mrb[0].mxu0
        %v1384 = vadd.f32 0.0, %v1383
        %v1385 = vpop.f32.mrb[0].mxu0
        %1386 = vmatprep.mubr.bf16.mxu0 %v1239
        %1387 = vmatmul.mubr.bf16.gmra.mrb[0].mxu0 %v1238
        %v1388 = vpop.f32.mrb[0].mxu0
        %v1389 = vadd.f32 0.0, %v1388
        %v1390 = vpop.f32.mrb[0].mxu0
        %v1391 = vpop.f32.mrb[0].mxu0
        %v1392 = vadd.f32 0.0, %v1391
        %v1393 = vpop.f32.mrb[0].mxu0
        %1394 = vmatprep.mubr.bf16.mxu0 %v1241
        %1395 = vmatmul.mubr.bf16.gmra.mrb[0].mxu0 %v1240
        %v1396 = vpop.f32.mrb[0].mxu0
        %v1397 = vadd.f32 0.0, %v1396
        %v1398 = vpop.f32.mrb[0].mxu0
        %v1399 = vpop.f32.mrb[0].mxu0
        %v1400 = vadd.f32 0.0, %v1399
        %v1401 = vpop.f32.mrb[0].mxu0
        %1402 = vdwg.mxu0
        %v1403 = vld [vmem:[%s2 + $0x40] sm:$0xff]
        %v1404 = vld [vmem:[%s2 + $0x48] sm:$0xff]
        %v1405 = vld [vmem:[%s2 + $0x50] sm:$0xff]
        %v1406 = vld [vmem:[%s2 + $0x58] sm:$0xff]
        %v1407 = vld [vmem:[%s2 + $0x60] sm:$0xff]
        %v1408 = vld [vmem:[%s2 + $0x68] sm:$0xff]
        %v1409 = vld [vmem:[%s2 + $0x70] sm:$0xff]
        %v1410 = vld [vmem:[%s2 + $0x78] sm:$0xff]
        %v1411 = vpack.c.bf16 %v1280, %v1277
        %v1412 = vpack.c.bf16 %v1288, %v1285
        %v1413 = vpack.c.bf16 %v1296, %v1293
        %v1414 = vpack.c.bf16 %v1304, %v1301
        %v1415 = vpack.c.bf16 %v1312, %v1309
        %v1416 = vpack.c.bf16 %v1320, %v1317
        %v1417 = vpack.c.bf16 %v1328, %v1325
        %v1418 = vpack.c.bf16 %v1336, %v1333
        %v1419 = vpack.c.bf16 %v1344, %v1341
        %v1420 = vpack.c.bf16 %v1352, %v1349
        %v1421 = vpack.c.bf16 %v1360, %v1357
        %v1422 = vpack.c.bf16 %v1368, %v1365
        %v1423 = vpack.c.bf16 %v1376, %v1373
        %v1424 = vpack.c.bf16 %v1384, %v1381
        %v1425 = vpack.c.bf16 %v1392, %v1389
        %v1426 = vpack.c.bf16 %v1400, %v1397
        %v1435 = vunpack.c.l.b16 %v1403
        %v1436 = vunpack.c.h.b16 %v1403
        %v1437 = vunpack.c.l.b16 %v1404
        %v1438 = vunpack.c.h.b16 %v1404
        %v1439 = vunpack.c.l.b16 %v1405
        %v1440 = vunpack.c.h.b16 %v1405
        %v1441 = vunpack.c.l.b16 %v1406
        %v1442 = vunpack.c.h.b16 %v1406
        %v1443 = vunpack.c.l.b16 %v1407
        %v1444 = vunpack.c.h.b16 %v1407
        %v1445 = vunpack.c.l.b16 %v1408
        %v1446 = vunpack.c.h.b16 %v1408
        %v1447 = vunpack.c.l.b16 %v1409
        %v1448 = vunpack.c.h.b16 %v1409
        %v1449 = vunpack.c.l.b16 %v1410
        %v1450 = vunpack.c.h.b16 %v1410
        %v1451 = vpack.c.b16 %v1437, %v1435
        %v1452 = vpack.c.b16 %v1438, %v1436
        %v1453 = vpack.c.b16 %v1441, %v1439
        %v1454 = vpack.c.b16 %v1442, %v1440
        %v1455 = vpack.c.b16 %v1445, %v1443
        %v1456 = vpack.c.b16 %v1446, %v1444
        %v1457 = vpack.c.b16 %v1449, %v1447
        %v1458 = vpack.c.b16 %v1450, %v1448
        %vm1467 = vcmask 523264
        %v1469 = vsel %vm1467, %v1411, 0
        %v1472 = vsel %vm1467, %v1412, 0
        %v1475 = vsel %vm1467, %v1413, 0
        %v1478 = vsel %vm1467, %v1414, 0
        %v1481 = vsel %vm1467, %v1415, 0
        %v1484 = vsel %vm1467, %v1416, 0
        %v1487 = vsel %vm1467, %v1417, 0
        %v1490 = vsel %vm1467, %v1418, 0
        %v1493 = vsel %vm1467, %v1419, 0
        %v1496 = vsel %vm1467, %v1420, 0
        %v1499 = vsel %vm1467, %v1421, 0
        %v1502 = vsel %vm1467, %v1422, 0
        %v1505 = vsel %vm1467, %v1423, 0
        %v1508 = vsel %vm1467, %v1424, 0
        %v1511 = vsel %vm1467, %v1425, 0
        %v1514 = vsel %vm1467, %v1426, 0
        %1516 = vmatprep.subr.bf16.mxu0 %v1452
        %1517 = vmatpush1.bf16.msra.mxu0 %v1451
        %1518 = vmatprep.subr.bf16.mxu0 %v1454
        %1519 = vmatpush1.bf16.msra.mxu0 %v1453
        %1520 = vmatprep.subr.bf16.mxu0 %v1456
        %1521 = vmatpush1.bf16.msra.mxu0 %v1455
        %1522 = vmatprep.subr.bf16.mxu0 %v1458
        %1523 = vmatpush1.bf16.msra.mxu0 %v1457
        %1524 = vmatprep.subr.bf16.mxu0 0
        %1525 = vmatpush1.bf16.msra.mxu0 0
        %1526 = vmatprep.subr.bf16.mxu0 0
        %1527 = vmatpush1.bf16.msra.mxu0 0
        %1528 = vmatprep.subr.bf16.mxu0 0
        %1529 = vmatpush1.bf16.msra.mxu0 0
        %1530 = vmatprep.subr.bf16.mxu0 0
        %1531 = vmatpush1.bf16.msra.mxu0 0
        %1532 = vmatprep.subr.bf16.mxu0 0
        %1533 = vmatpush1.bf16.msra.mxu0 0
        %1534 = vmatprep.subr.bf16.mxu0 0
        %1535 = vmatpush1.bf16.msra.mxu0 0
        %1536 = vmatprep.subr.bf16.mxu0 0
        %1537 = vmatpush1.bf16.msra.mxu0 0
        %1538 = vmatprep.subr.bf16.mxu0 0
        %1539 = vmatpush1.bf16.msra.mxu0 0
        %1540 = vmatprep.subr.bf16.mxu0 0
        %1541 = vmatpush1.bf16.msra.mxu0 0
        %1542 = vmatprep.subr.bf16.mxu0 0
        %1543 = vmatpush1.bf16.msra.mxu0 0
        %1544 = vmatprep.subr.bf16.mxu0 0
        %1545 = vmatpush1.bf16.msra.mxu0 0
        %1546 = vmatprep.subr.bf16.mxu0 0
        %1547 = vmatpush1.bf16.msra.mxu0 0
        %1548 = vmatprep.mubr.bf16.mxu0 0
        %1549 = vmatmul.mubr.bf16.gmra.mrb[0].mxu0 %v1469
        %v1550 = vpop.f32.mrb[0].mxu0
        %v1551 = vadd.f32 0.0, %v1550
        %v1552 = vpop.f32.mrb[0].mxu0
        %v1553 = vadd.f32 0.0, %v1552
        %v1554 = vpop.f32.mrb[0].mxu0
        %v1555 = vadd.f32 0.0, %v1554
        %v1556 = vpop.f32.mrb[0].mxu0
        %v1557 = vadd.f32 0.0, %v1556
        %1558 = vmatprep.mubr.bf16.mxu0 0
        %1559 = vmatmul.mubr.bf16.gmra.mrb[0].mxu0 %v1472
        %v1560 = vpop.f32.mrb[0].mxu0
        %v1561 = vadd.f32 0.0, %v1560
        %v1562 = vpop.f32.mrb[0].mxu0
        %v1563 = vadd.f32 0.0, %v1562
        %v1564 = vpop.f32.mrb[0].mxu0
        %v1565 = vadd.f32 0.0, %v1564
        %v1566 = vpop.f32.mrb[0].mxu0
        %v1567 = vadd.f32 0.0, %v1566
        %1568 = vmatprep.mubr.bf16.mxu0 0
        %1569 = vmatmul.mubr.bf16.gmra.mrb[0].mxu0 %v1475
        %v1570 = vpop.f32.mrb[0].mxu0
        %v1571 = vadd.f32 0.0, %v1570
        %v1572 = vpop.f32.mrb[0].mxu0
        %v1573 = vadd.f32 0.0, %v1572
        %v1574 = vpop.f32.mrb[0].mxu0
        %v1575 = vadd.f32 0.0, %v1574
        %v1576 = vpop.f32.mrb[0].mxu0
        %v1577 = vadd.f32 0.0, %v1576
        %1578 = vmatprep.mubr.bf16.mxu0 0
        %1579 = vmatmul.mubr.bf16.gmra.mrb[0].mxu0 %v1478
        %v1580 = vpop.f32.mrb[0].mxu0
        %v1581 = vadd.f32 0.0, %v1580
        %v1582 = vpop.f32.mrb[0].mxu0
        %v1583 = vadd.f32 0.0, %v1582
        %v1584 = vpop.f32.mrb[0].mxu0
        %v1585 = vadd.f32 0.0, %v1584
        %v1586 = vpop.f32.mrb[0].mxu0
        %v1587 = vadd.f32 0.0, %v1586
        %1588 = vmatprep.mubr.bf16.mxu0 0
        %1589 = vmatmul.mubr.bf16.gmra.mrb[0].mxu0 %v1481
        %v1590 = vpop.f32.mrb[0].mxu0
        %v1591 = vadd.f32 0.0, %v1590
        %v1592 = vpop.f32.mrb[0].mxu0
        %v1593 = vadd.f32 0.0, %v1592
        %v1594 = vpop.f32.mrb[0].mxu0
        %v1595 = vadd.f32 0.0, %v1594
        %v1596 = vpop.f32.mrb[0].mxu0
        %v1597 = vadd.f32 0.0, %v1596
        %1598 = vmatprep.mubr.bf16.mxu0 0
        %1599 = vmatmul.mubr.bf16.gmra.mrb[0].mxu0 %v1484
        %v1600 = vpop.f32.mrb[0].mxu0
        %v1601 = vadd.f32 0.0, %v1600
        %v1602 = vpop.f32.mrb[0].mxu0
        %v1603 = vadd.f32 0.0, %v1602
        %v1604 = vpop.f32.mrb[0].mxu0
        %v1605 = vadd.f32 0.0, %v1604
        %v1606 = vpop.f32.mrb[0].mxu0
        %v1607 = vadd.f32 0.0, %v1606
        %1608 = vmatprep.mubr.bf16.mxu0 0
        %1609 = vmatmul.mubr.bf16.gmra.mrb[0].mxu0 %v1487
        %v1610 = vpop.f32.mrb[0].mxu0
        %v1611 = vadd.f32 0.0, %v1610
        %v1612 = vpop.f32.mrb[0].mxu0
        %v1613 = vadd.f32 0.0, %v1612
        %v1614 = vpop.f32.mrb[0].mxu0
        %v1615 = vadd.f32 0.0, %v1614
        %v1616 = vpop.f32.mrb[0].mxu0
        %v1617 = vadd.f32 0.0, %v1616
        %1618 = vmatprep.mubr.bf16.mxu0 0
        %1619 = vmatmul.mubr.bf16.gmra.mrb[0].mxu0 %v1490
        %v1620 = vpop.f32.mrb[0].mxu0
        %v1621 = vadd.f32 0.0, %v1620
        %v1622 = vpop.f32.mrb[0].mxu0
        %v1623 = vadd.f32 0.0, %v1622
        %v1624 = vpop.f32.mrb[0].mxu0
        %v1625 = vadd.f32 0.0, %v1624
        %v1626 = vpop.f32.mrb[0].mxu0
        %v1627 = vadd.f32 0.0, %v1626
        %1628 = vmatprep.mubr.bf16.mxu0 0
        %1629 = vmatmul.mubr.bf16.gmra.mrb[0].mxu0 %v1493
        %v1630 = vpop.f32.mrb[0].mxu0
        %v1631 = vadd.f32 0.0, %v1630
        %v1632 = vpop.f32.mrb[0].mxu0
        %v1633 = vadd.f32 0.0, %v1632
        %v1634 = vpop.f32.mrb[0].mxu0
        %v1635 = vadd.f32 0.0, %v1634
        %v1636 = vpop.f32.mrb[0].mxu0
        %v1637 = vadd.f32 0.0, %v1636
        %1638 = vmatprep.mubr.bf16.mxu0 0
        %1639 = vmatmul.mubr.bf16.gmra.mrb[0].mxu0 %v1496
        %v1640 = vpop.f32.mrb[0].mxu0
        %v1641 = vadd.f32 0.0, %v1640
        %v1642 = vpop.f32.mrb[0].mxu0
        %v1643 = vadd.f32 0.0, %v1642
        %v1644 = vpop.f32.mrb[0].mxu0
        %v1645 = vadd.f32 0.0, %v1644
        %v1646 = vpop.f32.mrb[0].mxu0
        %v1647 = vadd.f32 0.0, %v1646
        %1648 = vmatprep.mubr.bf16.mxu0 0
        %1649 = vmatmul.mubr.bf16.gmra.mrb[0].mxu0 %v1499
        %v1650 = vpop.f32.mrb[0].mxu0
        %v1651 = vadd.f32 0.0, %v1650
        %v1652 = vpop.f32.mrb[0].mxu0
        %v1653 = vadd.f32 0.0, %v1652
        %v1654 = vpop.f32.mrb[0].mxu0
        %v1655 = vadd.f32 0.0, %v1654
        %v1656 = vpop.f32.mrb[0].mxu0
        %v1657 = vadd.f32 0.0, %v1656
        %1658 = vmatprep.mubr.bf16.mxu0 0
        %1659 = vmatmul.mubr.bf16.gmra.mrb[0].mxu0 %v1502
        %v1660 = vpop.f32.mrb[0].mxu0
        %v1661 = vadd.f32 0.0, %v1660
        %v1662 = vpop.f32.mrb[0].mxu0
        %v1663 = vadd.f32 0.0, %v1662
        %v1664 = vpop.f32.mrb[0].mxu0
        %v1665 = vadd.f32 0.0, %v1664
        %v1666 = vpop.f32.mrb[0].mxu0
        %v1667 = vadd.f32 0.0, %v1666
        %1668 = vmatprep.mubr.bf16.mxu0 0
        %1669 = vmatmul.mubr.bf16.gmra.mrb[0].mxu0 %v1505
        %v1670 = vpop.f32.mrb[0].mxu0
        %v1671 = vadd.f32 0.0, %v1670
        %v1672 = vpop.f32.mrb[0].mxu0
        %v1673 = vadd.f32 0.0, %v1672
        %v1674 = vpop.f32.mrb[0].mxu0
        %v1675 = vadd.f32 0.0, %v1674
        %v1676 = vpop.f32.mrb[0].mxu0
        %v1677 = vadd.f32 0.0, %v1676
        %1678 = vmatprep.mubr.bf16.mxu0 0
        %1679 = vmatmul.mubr.bf16.gmra.mrb[0].mxu0 %v1508
        %v1680 = vpop.f32.mrb[0].mxu0
        %v1681 = vadd.f32 0.0, %v1680
        %v1682 = vpop.f32.mrb[0].mxu0
        %v1683 = vadd.f32 0.0, %v1682
        %v1684 = vpop.f32.mrb[0].mxu0
        %v1685 = vadd.f32 0.0, %v1684
        %v1686 = vpop.f32.mrb[0].mxu0
        %v1687 = vadd.f32 0.0, %v1686
        %1688 = vmatprep.mubr.bf16.mxu0 0
        %1689 = vmatmul.mubr.bf16.gmra.mrb[0].mxu0 %v1511
        %v1690 = vpop.f32.mrb[0].mxu0
        %v1691 = vadd.f32 0.0, %v1690
        %v1692 = vpop.f32.mrb[0].mxu0
        %v1693 = vadd.f32 0.0, %v1692
        %v1694 = vpop.f32.mrb[0].mxu0
        %v1695 = vadd.f32 0.0, %v1694
        %v1696 = vpop.f32.mrb[0].mxu0
        %v1697 = vadd.f32 0.0, %v1696
        %1698 = vmatprep.mubr.bf16.mxu0 0
        %1699 = vmatmul.mubr.bf16.gmra.mrb[0].mxu0 %v1514
        %v1700 = vpop.f32.mrb[0].mxu0
        %v1701 = vadd.f32 0.0, %v1700
        %v1702 = vpop.f32.mrb[0].mxu0
        %v1703 = vadd.f32 0.0, %v1702
        %v1704 = vpop.f32.mrb[0].mxu0
        %v1705 = vadd.f32 0.0, %v1704
        %v1706 = vpop.f32.mrb[0].mxu0
        %v1707 = vadd.f32 0.0, %v1706
        %1708 = vdwg.mxu0
        %v1717 = vunpack.c.l.b16 %v898
        %v1718 = vunpack.c.h.b16 %v898
        %v1719 = vunpack.c.l.b16 %v899
        %v1720 = vunpack.c.h.b16 %v899
        %v1721 = vunpack.c.l.b16 %v900
        %v1722 = vunpack.c.h.b16 %v900
        %v1723 = vunpack.c.l.b16 %v901
        %v1724 = vunpack.c.h.b16 %v901
        %v1725 = vunpack.c.l.b16 %v902
        %v1726 = vunpack.c.h.b16 %v902
        %v1727 = vunpack.c.l.b16 %v903
        %v1728 = vunpack.c.h.b16 %v903
        %v1729 = vunpack.c.l.b16 %v904
        %v1730 = vunpack.c.h.b16 %v904
        %v1731 = vunpack.c.l.b16 %v905
        %v1732 = vunpack.c.h.b16 %v905
        %v1733 = vpack.c.b16 %v1719, %v1717
        %v1734 = vpack.c.b16 %v1720, %v1718
        %v1735 = vpack.c.b16 %v1723, %v1721
        %v1736 = vpack.c.b16 %v1724, %v1722
        %v1737 = vpack.c.b16 %v1727, %v1725
        %v1738 = vpack.c.b16 %v1728, %v1726
        %v1739 = vpack.c.b16 %v1731, %v1729
        %v1740 = vpack.c.b16 %v1732, %v1730
        %v1750 = vsel %vm1467, %v906, 0
        %v1753 = vsel %vm1467, %v907, 0
        %v1756 = vsel %vm1467, %v908, 0
        %v1759 = vsel %vm1467, %v909, 0
        %v1762 = vsel %vm1467, %v910, 0
        %v1765 = vsel %vm1467, %v911, 0
        %v1768 = vsel %vm1467, %v912, 0
        %v1771 = vsel %vm1467, %v913, 0
        %v1774 = vsel %vm1467, %v914, 0
        %v1777 = vsel %vm1467, %v915, 0
        %v1780 = vsel %vm1467, %v916, 0
        %v1783 = vsel %vm1467, %v917, 0
        %v1786 = vsel %vm1467, %v918, 0
        %v1789 = vsel %vm1467, %v919, 0
        %v1792 = vsel %vm1467, %v920, 0
        %v1795 = vsel %vm1467, %v921, 0
        %1797 = vmatprep.subr.bf16.mxu0 %v1734
        %1798 = vmatpush1.bf16.msra.mxu0 %v1733
        %1799 = vmatprep.subr.bf16.mxu0 %v1736
        %1800 = vmatpush1.bf16.msra.mxu0 %v1735
        %1801 = vmatprep.subr.bf16.mxu0 %v1738
        %1802 = vmatpush1.bf16.msra.mxu0 %v1737
        %1803 = vmatprep.subr.bf16.mxu0 %v1740
        %1804 = vmatpush1.bf16.msra.mxu0 %v1739
        %1805 = vmatprep.subr.bf16.mxu0 0
        %1806 = vmatpush1.bf16.msra.mxu0 0
        %1807 = vmatprep.subr.bf16.mxu0 0
        %1808 = vmatpush1.bf16.msra.mxu0 0
        %1809 = vmatprep.subr.bf16.mxu0 0
        %1810 = vmatpush1.bf16.msra.mxu0 0
        %1811 = vmatprep.subr.bf16.mxu0 0
        %1812 = vmatpush1.bf16.msra.mxu0 0
        %1813 = vmatprep.subr.bf16.mxu0 0
        %1814 = vmatpush1.bf16.msra.mxu0 0
        %1815 = vmatprep.subr.bf16.mxu0 0
        %1816 = vmatpush1.bf16.msra.mxu0 0
        %1817 = vmatprep.subr.bf16.mxu0 0
        %1818 = vmatpush1.bf16.msra.mxu0 0
        %1819 = vmatprep.subr.bf16.mxu0 0
        %1820 = vmatpush1.bf16.msra.mxu0 0
        %1821 = vmatprep.subr.bf16.mxu0 0
        %1822 = vmatpush1.bf16.msra.mxu0 0
        %1823 = vmatprep.subr.bf16.mxu0 0
        %1824 = vmatpush1.bf16.msra.mxu0 0
        %1825 = vmatprep.subr.bf16.mxu0 0
        %1826 = vmatpush1.bf16.msra.mxu0 0
        %1827 = vmatprep.subr.bf16.mxu0 0
        %1828 = vmatpush1.bf16.msra.mxu0 0
        %1829 = vmatprep.mubr.bf16.mxu0 0
        %1830 = vmatmul.mubr.bf16.gmra.mrb[0].mxu0 %v1750
        %v1831 = vpop.f32.mrb[0].mxu0
        %v1832 = vadd.f32 %v1551, %v1831
        %v1833 = vpop.f32.mrb[0].mxu0
        %v1834 = vadd.f32 %v1553, %v1833
        %v1835 = vpop.f32.mrb[0].mxu0
        %v1836 = vadd.f32 %v1555, %v1835
        %v1837 = vpop.f32.mrb[0].mxu0
        %v1838 = vadd.f32 %v1557, %v1837
        %1839 = vmatprep.mubr.bf16.mxu0 0
        %1840 = vmatmul.mubr.bf16.gmra.mrb[0].mxu0 %v1753
        %v1841 = vpop.f32.mrb[0].mxu0
        %v1842 = vadd.f32 %v1561, %v1841
        %v1843 = vpop.f32.mrb[0].mxu0
        %v1844 = vadd.f32 %v1563, %v1843
        %v1845 = vpop.f32.mrb[0].mxu0
        %v1846 = vadd.f32 %v1565, %v1845
        %v1847 = vpop.f32.mrb[0].mxu0
        %v1848 = vadd.f32 %v1567, %v1847
        %1849 = vmatprep.mubr.bf16.mxu0 0
        %1850 = vmatmul.mubr.bf16.gmra.mrb[0].mxu0 %v1756
        %v1851 = vpop.f32.mrb[0].mxu0
        %v1852 = vadd.f32 %v1571, %v1851
        %v1853 = vpop.f32.mrb[0].mxu0
        %v1854 = vadd.f32 %v1573, %v1853
        %v1855 = vpop.f32.mrb[0].mxu0
        %v1856 = vadd.f32 %v1575, %v1855
        %v1857 = vpop.f32.mrb[0].mxu0
        %v1858 = vadd.f32 %v1577, %v1857
        %1859 = vmatprep.mubr.bf16.mxu0 0
        %1860 = vmatmul.mubr.bf16.gmra.mrb[0].mxu0 %v1759
        %v1861 = vpop.f32.mrb[0].mxu0
        %v1862 = vadd.f32 %v1581, %v1861
        %v1863 = vpop.f32.mrb[0].mxu0
        %v1864 = vadd.f32 %v1583, %v1863
        %v1865 = vpop.f32.mrb[0].mxu0
        %v1866 = vadd.f32 %v1585, %v1865
        %v1867 = vpop.f32.mrb[0].mxu0
        %v1868 = vadd.f32 %v1587, %v1867
        %1869 = vmatprep.mubr.bf16.mxu0 0
        %1870 = vmatmul.mubr.bf16.gmra.mrb[0].mxu0 %v1762
        %v1871 = vpop.f32.mrb[0].mxu0
        %v1872 = vadd.f32 %v1591, %v1871
        %v1873 = vpop.f32.mrb[0].mxu0
        %v1874 = vadd.f32 %v1593, %v1873
        %v1875 = vpop.f32.mrb[0].mxu0
        %v1876 = vadd.f32 %v1595, %v1875
        %v1877 = vpop.f32.mrb[0].mxu0
        %v1878 = vadd.f32 %v1597, %v1877
        %1879 = vmatprep.mubr.bf16.mxu0 0
        %1880 = vmatmul.mubr.bf16.gmra.mrb[0].mxu0 %v1765
        %v1881 = vpop.f32.mrb[0].mxu0
        %v1882 = vadd.f32 %v1601, %v1881
        %v1883 = vpop.f32.mrb[0].mxu0
        %v1884 = vadd.f32 %v1603, %v1883
        %v1885 = vpop.f32.mrb[0].mxu0
        %v1886 = vadd.f32 %v1605, %v1885
        %v1887 = vpop.f32.mrb[0].mxu0
        %v1888 = vadd.f32 %v1607, %v1887
        %1889 = vmatprep.mubr.bf16.mxu0 0
        %1890 = vmatmul.mubr.bf16.gmra.mrb[0].mxu0 %v1768
        %v1891 = vpop.f32.mrb[0].mxu0
        %v1892 = vadd.f32 %v1611, %v1891
        %v1893 = vpop.f32.mrb[0].mxu0
        %v1894 = vadd.f32 %v1613, %v1893
        %v1895 = vpop.f32.mrb[0].mxu0
        %v1896 = vadd.f32 %v1615, %v1895
        %v1897 = vpop.f32.mrb[0].mxu0
        %v1898 = vadd.f32 %v1617, %v1897
        %1899 = vmatprep.mubr.bf16.mxu0 0
        %1900 = vmatmul.mubr.bf16.gmra.mrb[0].mxu0 %v1771
        %v1901 = vpop.f32.mrb[0].mxu0
        %v1902 = vadd.f32 %v1621, %v1901
        %v1903 = vpop.f32.mrb[0].mxu0
        %v1904 = vadd.f32 %v1623, %v1903
        %v1905 = vpop.f32.mrb[0].mxu0
        %v1906 = vadd.f32 %v1625, %v1905
        %v1907 = vpop.f32.mrb[0].mxu0
        %v1908 = vadd.f32 %v1627, %v1907
        %1909 = vmatprep.mubr.bf16.mxu0 0
        %1910 = vmatmul.mubr.bf16.gmra.mrb[0].mxu0 %v1774
        %v1911 = vpop.f32.mrb[0].mxu0
        %v1912 = vadd.f32 %v1631, %v1911
        %v1913 = vpop.f32.mrb[0].mxu0
        %v1914 = vadd.f32 %v1633, %v1913
        %v1915 = vpop.f32.mrb[0].mxu0
        %v1916 = vadd.f32 %v1635, %v1915
        %v1917 = vpop.f32.mrb[0].mxu0
        %v1918 = vadd.f32 %v1637, %v1917
        %1919 = vmatprep.mubr.bf16.mxu0 0
        %1920 = vmatmul.mubr.bf16.gmra.mrb[0].mxu0 %v1777
        %v1921 = vpop.f32.mrb[0].mxu0
        %v1922 = vadd.f32 %v1641, %v1921
        %v1923 = vpop.f32.mrb[0].mxu0
        %v1924 = vadd.f32 %v1643, %v1923
        %v1925 = vpop.f32.mrb[0].mxu0
        %v1926 = vadd.f32 %v1645, %v1925
        %v1927 = vpop.f32.mrb[0].mxu0
        %v1928 = vadd.f32 %v1647, %v1927
        %1929 = vmatprep.mubr.bf16.mxu0 0
        %1930 = vmatmul.mubr.bf16.gmra.mrb[0].mxu0 %v1780
        %v1931 = vpop.f32.mrb[0].mxu0
        %v1932 = vadd.f32 %v1651, %v1931
        %v1933 = vpop.f32.mrb[0].mxu0
        %v1934 = vadd.f32 %v1653, %v1933
        %v1935 = vpop.f32.mrb[0].mxu0
        %v1936 = vadd.f32 %v1655, %v1935
        %v1937 = vpop.f32.mrb[0].mxu0
        %v1938 = vadd.f32 %v1657, %v1937
        %1939 = vmatprep.mubr.bf16.mxu0 0
        %1940 = vmatmul.mubr.bf16.gmra.mrb[0].mxu0 %v1783
        %v1941 = vpop.f32.mrb[0].mxu0
        %v1942 = vadd.f32 %v1661, %v1941
        %v1943 = vpop.f32.mrb[0].mxu0
        %v1944 = vadd.f32 %v1663, %v1943
        %v1945 = vpop.f32.mrb[0].mxu0
        %v1946 = vadd.f32 %v1665, %v1945
        %v1947 = vpop.f32.mrb[0].mxu0
        %v1948 = vadd.f32 %v1667, %v1947
        %1949 = vmatprep.mubr.bf16.mxu0 0
        %1950 = vmatmul.mubr.bf16.gmra.mrb[0].mxu0 %v1786
        %v1951 = vpop.f32.mrb[0].mxu0
        %v1952 = vadd.f32 %v1671, %v1951
        %v1953 = vpop.f32.mrb[0].mxu0
        %v1954 = vadd.f32 %v1673, %v1953
        %v1955 = vpop.f32.mrb[0].mxu0
        %v1956 = vadd.f32 %v1675, %v1955
        %v1957 = vpop.f32.mrb[0].mxu0
        %v1958 = vadd.f32 %v1677, %v1957
        %1959 = vmatprep.mubr.bf16.mxu0 0
        %1960 = vmatmul.mubr.bf16.gmra.mrb[0].mxu0 %v1789
        %v1961 = vpop.f32.mrb[0].mxu0
        %v1962 = vadd.f32 %v1681, %v1961
        %v1963 = vpop.f32.mrb[0].mxu0
        %v1964 = vadd.f32 %v1683, %v1963
        %v1965 = vpop.f32.mrb[0].mxu0
        %v1966 = vadd.f32 %v1685, %v1965
        %v1967 = vpop.f32.mrb[0].mxu0
        %v1968 = vadd.f32 %v1687, %v1967
        %1969 = vmatprep.mubr.bf16.mxu0 0
        %1970 = vmatmul.mubr.bf16.gmra.mrb[0].mxu0 %v1792
        %v1971 = vpop.f32.mrb[0].mxu0
        %v1972 = vadd.f32 %v1691, %v1971
        %v1973 = vpop.f32.mrb[0].mxu0
        %v1974 = vadd.f32 %v1693, %v1973
        %v1975 = vpop.f32.mrb[0].mxu0
        %v1976 = vadd.f32 %v1695, %v1975
        %v1977 = vpop.f32.mrb[0].mxu0
        %v1978 = vadd.f32 %v1697, %v1977
        %1979 = vmatprep.mubr.bf16.mxu0 0
        %1980 = vmatmul.mubr.bf16.gmra.mrb[0].mxu0 %v1795
        %v1981 = vpop.f32.mrb[0].mxu0
        %v1982 = vadd.f32 %v1701, %v1981
        %v1983 = vpop.f32.mrb[0].mxu0
        %v1984 = vadd.f32 %v1703, %v1983
        %v1985 = vpop.f32.mrb[0].mxu0
        %v1986 = vadd.f32 %v1705, %v1985
        %v1987 = vpop.f32.mrb[0].mxu0
        %v1988 = vadd.f32 %v1707, %v1987
        %1989 = vdwg.mxu0
        %v1990 = vld [vmem:[%s3] sm:$0x3]
        %v1992 = vlaneseq
        %v1993 = vshrl.u32 %v1992, 7
        %v1994 = vsub.s32 0, %v1993
        %v1995 = vrot.slane %v1990, %v1994
        %v1996 = vlaneseq
        %v1997 = vshrl.u32 %v1996, 7
        %v1998 = vsub.s32 1, %v1997
        %v1999 = vrot.slane %v1990, %v1998
        %v2002 = vadd.f32 %v1832, %v1995
        %v2003 = vadd.f32 %v1834, %v1999
        %v2004 = vadd.f32 %v1836, %v1995
        %v2005 = vadd.f32 %v1838, %v1999
        %v2006 = vadd.f32 %v1842, %v1995
        %v2007 = vadd.f32 %v1844, %v1999
        %v2008 = vadd.f32 %v1846, %v1995
        %v2009 = vadd.f32 %v1848, %v1999
        %v2010 = vadd.f32 %v1852, %v1995
        %v2011 = vadd.f32 %v1854, %v1999
        %v2012 = vadd.f32 %v1856, %v1995
        %v2013 = vadd.f32 %v1858, %v1999
        %v2014 = vadd.f32 %v1862, %v1995
        %v2015 = vadd.f32 %v1864, %v1999
        %v2016 = vadd.f32 %v1866, %v1995
        %v2017 = vadd.f32 %v1868, %v1999
        %v2018 = vadd.f32 %v1872, %v1995
        %v2019 = vadd.f32 %v1874, %v1999
        %v2020 = vadd.f32 %v1876, %v1995
        %v2021 = vadd.f32 %v1878, %v1999
        %v2022 = vadd.f32 %v1882, %v1995
        %v2023 = vadd.f32 %v1884, %v1999
        %v2024 = vadd.f32 %v1886, %v1995
        %v2025 = vadd.f32 %v1888, %v1999
        %v2026 = vadd.f32 %v1892, %v1995
        %v2027 = vadd.f32 %v1894, %v1999
        %v2028 = vadd.f32 %v1896, %v1995
        %v2029 = vadd.f32 %v1898, %v1999
        %v2030 = vadd.f32 %v1902, %v1995
        %v2031 = vadd.f32 %v1904, %v1999
        %v2032 = vadd.f32 %v1906, %v1995
        %v2033 = vadd.f32 %v1908, %v1999
        %v2034 = vadd.f32 %v1912, %v1995
        %v2035 = vadd.f32 %v1914, %v1999
        %v2036 = vadd.f32 %v1916, %v1995
        %v2037 = vadd.f32 %v1918, %v1999
        %v2038 = vadd.f32 %v1922, %v1995
        %v2039 = vadd.f32 %v1924, %v1999
        %v2040 = vadd.f32 %v1926, %v1995
        %v2041 = vadd.f32 %v1928, %v1999
        %v2042 = vadd.f32 %v1932, %v1995
        %v2043 = vadd.f32 %v1934, %v1999
        %v2044 = vadd.f32 %v1936, %v1995
        %v2045 = vadd.f32 %v1938, %v1999
        %v2046 = vadd.f32 %v1942, %v1995
        %v2047 = vadd.f32 %v1944, %v1999
        %v2048 = vadd.f32 %v1946, %v1995
        %v2049 = vadd.f32 %v1948, %v1999
        %v2050 = vadd.f32 %v1952, %v1995
        %v2051 = vadd.f32 %v1954, %v1999
        %v2052 = vadd.f32 %v1956, %v1995
        %v2053 = vadd.f32 %v1958, %v1999
        %v2054 = vadd.f32 %v1962, %v1995
        %v2055 = vadd.f32 %v1964, %v1999
        %v2056 = vadd.f32 %v1966, %v1995
        %v2057 = vadd.f32 %v1968, %v1999
        %v2058 = vadd.f32 %v1972, %v1995
        %v2059 = vadd.f32 %v1974, %v1999
        %v2060 = vadd.f32 %v1976, %v1995
        %v2061 = vadd.f32 %v1978, %v1999
        %v2062 = vadd.f32 %v1982, %v1995
        %v2063 = vadd.f32 %v1984, %v1999
        %v2064 = vadd.f32 %v1986, %v1995
        %v2065 = vadd.f32 %v1988, %v1999
        %v2066 = vtanh.pop %v2002
        %v2067 = vtanh.pop %v2003
        %v2068 = vtanh.pop %v2004
        %v2069 = vtanh.pop %v2005
        %v2070 = vtanh.pop %v2006
        %v2071 = vtanh.pop %v2007
        %v2072 = vtanh.pop %v2008
        %v2073 = vtanh.pop %v2009
        %v2074 = vtanh.pop %v2010
        %v2075 = vtanh.pop %v2011
        %v2076 = vtanh.pop %v2012
        %v2077 = vtanh.pop %v2013
        %v2078 = vtanh.pop %v2014
        %v2079 = vtanh.pop %v2015
        %v2080 = vtanh.pop %v2016
        %v2081 = vtanh.pop %v2017
        %v2082 = vtanh.pop %v2018
        %v2083 = vtanh.pop %v2019
        %v2084 = vtanh.pop %v2020
        %v2085 = vtanh.pop %v2021
        %v2086 = vtanh.pop %v2022
        %v2087 = vtanh.pop %v2023
        %v2088 = vtanh.pop %v2024
        %v2089 = vtanh.pop %v2025
        %v2090 = vtanh.pop %v2026
        %v2091 = vtanh.pop %v2027
        %v2092 = vtanh.pop %v2028
        %v2093 = vtanh.pop %v2029
        %v2094 = vtanh.pop %v2030
        %v2095 = vtanh.pop %v2031
        %v2096 = vtanh.pop %v2032
        %v2097 = vtanh.pop %v2033
        %v2098 = vtanh.pop %v2034
        %v2099 = vtanh.pop %v2035
        %v2100 = vtanh.pop %v2036
        %v2101 = vtanh.pop %v2037
        %v2102 = vtanh.pop %v2038
        %v2103 = vtanh.pop %v2039
        %v2104 = vtanh.pop %v2040
        %v2105 = vtanh.pop %v2041
        %v2106 = vtanh.pop %v2042
        %v2107 = vtanh.pop %v2043
        %v2108 = vtanh.pop %v2044
        %v2109 = vtanh.pop %v2045
        %v2110 = vtanh.pop %v2046
        %v2111 = vtanh.pop %v2047
        %v2112 = vtanh.pop %v2048
        %v2113 = vtanh.pop %v2049
        %v2114 = vtanh.pop %v2050
        %v2115 = vtanh.pop %v2051
        %v2116 = vtanh.pop %v2052
        %v2117 = vtanh.pop %v2053
        %v2118 = vtanh.pop %v2054
        %v2119 = vtanh.pop %v2055
        %v2120 = vtanh.pop %v2056
        %v2121 = vtanh.pop %v2057
        %v2122 = vtanh.pop %v2058
        %v2123 = vtanh.pop %v2059
        %v2124 = vtanh.pop %v2060
        %v2125 = vtanh.pop %v2061
        %v2126 = vtanh.pop %v2062
        %v2127 = vtanh.pop %v2063
        %v2128 = vtanh.pop %v2064
        %v2129 = vtanh.pop %v2065
        %v2130 = vpack.c.bf16 %v2068, %v2066
        %v2131 = vpack.c.bf16 %v2069, %v2067
        %v2132 = vpack.c.bf16 %v2072, %v2070
        %v2133 = vpack.c.bf16 %v2073, %v2071
        %v2134 = vpack.c.bf16 %v2076, %v2074
        %v2135 = vpack.c.bf16 %v2077, %v2075
        %v2136 = vpack.c.bf16 %v2080, %v2078
        %v2137 = vpack.c.bf16 %v2081, %v2079
        %v2138 = vpack.c.bf16 %v2084, %v2082
        %v2139 = vpack.c.bf16 %v2085, %v2083
        %v2140 = vpack.c.bf16 %v2088, %v2086
        %v2141 = vpack.c.bf16 %v2089, %v2087
        %v2142 = vpack.c.bf16 %v2092, %v2090
        %v2143 = vpack.c.bf16 %v2093, %v2091
        %v2144 = vpack.c.bf16 %v2096, %v2094
        %v2145 = vpack.c.bf16 %v2097, %v2095
        %v2146 = vpack.c.bf16 %v2100, %v2098
        %v2147 = vpack.c.bf16 %v2101, %v2099
        %v2148 = vpack.c.bf16 %v2104, %v2102
        %v2149 = vpack.c.bf16 %v2105, %v2103
        %v2150 = vpack.c.bf16 %v2108, %v2106
        %v2151 = vpack.c.bf16 %v2109, %v2107
        %v2152 = vpack.c.bf16 %v2112, %v2110
        %v2153 = vpack.c.bf16 %v2113, %v2111
        %v2154 = vpack.c.bf16 %v2116, %v2114
        %v2155 = vpack.c.bf16 %v2117, %v2115
        %v2156 = vpack.c.bf16 %v2120, %v2118
        %v2157 = vpack.c.bf16 %v2121, %v2119
        %v2158 = vpack.c.bf16 %v2124, %v2122
        %v2159 = vpack.c.bf16 %v2125, %v2123
        %v2160 = vpack.c.bf16 %v2128, %v2126
        %v2161 = vpack.c.bf16 %v2129, %v2127
        %v2162 = vld [vmem:[%s4] sm:$0xff]
        %v2163 = vld [vmem:[%s4 + $0x8] sm:$0xff]
        %v2164 = vld [vmem:[%s4 + $0x10] sm:$0xff]
        %v2165 = vld [vmem:[%s4 + $0x18] sm:$0xff]
        %v2166 = vld [vmem:[%s4 + $0x20] sm:$0xff]
        %v2167 = vld [vmem:[%s4 + $0x28] sm:$0xff]
        %v2168 = vld [vmem:[%s4 + $0x30] sm:$0xff]
        %v2169 = vld [vmem:[%s4 + $0x38] sm:$0xff]
        %v2170 = vld [vmem:[%s4 + $0x40] sm:$0xff]
        %v2171 = vld [vmem:[%s4 + $0x48] sm:$0xff]
        %v2172 = vld [vmem:[%s4 + $0x50] sm:$0xff]
        %v2173 = vld [vmem:[%s4 + $0x58] sm:$0xff]
        %v2174 = vld [vmem:[%s4 + $0x60] sm:$0xff]
        %v2175 = vld [vmem:[%s4 + $0x68] sm:$0xff]
        %v2176 = vld [vmem:[%s4 + $0x70] sm:$0xff]
        %v2177 = vld [vmem:[%s4 + $0x78] sm:$0xff]
        %v2178 = vld [vmem:[%s4 + $0x80] sm:$0xff]
        %v2179 = vld [vmem:[%s4 + $0x88] sm:$0xff]
        %v2180 = vld [vmem:[%s4 + $0x90] sm:$0xff]
        %v2181 = vld [vmem:[%s4 + $0x98] sm:$0xff]
        %v2182 = vld [vmem:[%s4 + $0xa0] sm:$0xff]
        %v2183 = vld [vmem:[%s4 + $0xa8] sm:$0xff]
        %v2184 = vld [vmem:[%s4 + $0xb0] sm:$0xff]
        %v2185 = vld [vmem:[%s4 + $0xb8] sm:$0xff]
        %v2186 = vld [vmem:[%s4 + $0xc0] sm:$0xff]
        %v2187 = vld [vmem:[%s4 + $0xc8] sm:$0xff]
        %v2188 = vld [vmem:[%s4 + $0xd0] sm:$0xff]
        %v2189 = vld [vmem:[%s4 + $0xd8] sm:$0xff]
        %v2190 = vld [vmem:[%s4 + $0xe0] sm:$0xff]
        %v2191 = vld [vmem:[%s4 + $0xe8] sm:$0xff]
        %v2192 = vld [vmem:[%s4 + $0xf0] sm:$0xff]
        %v2193 = vld [vmem:[%s4 + $0xf8] sm:$0xff]
        %v2194 = vld [vmem:[%s5] sm:$0x3]
        %v2196 = vlaneseq
        %v2197 = vshrl.u32 %v2196, 7
        %v2198 = vsub.s32 0, %v2197
        %v2199 = vrot.slane %v2194, %v2198
        %v2200 = vlaneseq
        %v2201 = vshrl.u32 %v2200, 7
        %v2202 = vsub.s32 1, %v2201
        %v2203 = vrot.slane %v2194, %v2202
        %v2238 = vunpack.c.l.b16 %v2162
        %v2239 = vunpack.c.h.b16 %v2162
        %v2240 = vunpack.c.l.b16 %v2163
        %v2241 = vunpack.c.h.b16 %v2163
        %v2242 = vunpack.c.l.b16 %v2164
        %v2243 = vunpack.c.h.b16 %v2164
        %v2244 = vunpack.c.l.b16 %v2165
        %v2245 = vunpack.c.h.b16 %v2165
        %v2246 = vunpack.c.l.b16 %v2166
        %v2247 = vunpack.c.h.b16 %v2166
        %v2248 = vunpack.c.l.b16 %v2167
        %v2249 = vunpack.c.h.b16 %v2167
        %v2250 = vunpack.c.l.b16 %v2168
        %v2251 = vunpack.c.h.b16 %v2168
        %v2252 = vunpack.c.l.b16 %v2169
        %v2253 = vunpack.c.h.b16 %v2169
        %v2254 = vunpack.c.l.b16 %v2170
        %v2255 = vunpack.c.h.b16 %v2170
        %v2256 = vunpack.c.l.b16 %v2171
        %v2257 = vunpack.c.h.b16 %v2171
        %v2258 = vunpack.c.l.b16 %v2172
        %v2259 = vunpack.c.h.b16 %v2172
        %v2260 = vunpack.c.l.b16 %v2173
        %v2261 = vunpack.c.h.b16 %v2173
        %v2262 = vunpack.c.l.b16 %v2174
        %v2263 = vunpack.c.h.b16 %v2174
        %v2264 = vunpack.c.l.b16 %v2175
        %v2265 = vunpack.c.h.b16 %v2175
        %v2266 = vunpack.c.l.b16 %v2176
        %v2267 = vunpack.c.h.b16 %v2176
        %v2268 = vunpack.c.l.b16 %v2177
        %v2269 = vunpack.c.h.b16 %v2177
        %v2270 = vunpack.c.l.b16 %v2178
        %v2271 = vunpack.c.h.b16 %v2178
        %v2272 = vunpack.c.l.b16 %v2179
        %v2273 = vunpack.c.h.b16 %v2179
        %v2274 = vunpack.c.l.b16 %v2180
        %v2275 = vunpack.c.h.b16 %v2180
        %v2276 = vunpack.c.l.b16 %v2181
        %v2277 = vunpack.c.h.b16 %v2181
        %v2278 = vunpack.c.l.b16 %v2182
        %v2279 = vunpack.c.h.b16 %v2182
        %v2280 = vunpack.c.l.b16 %v2183
        %v2281 = vunpack.c.h.b16 %v2183
        %v2282 = vunpack.c.l.b16 %v2184
        %v2283 = vunpack.c.h.b16 %v2184
        %v2284 = vunpack.c.l.b16 %v2185
        %v2285 = vunpack.c.h.b16 %v2185
        %v2286 = vunpack.c.l.b16 %v2186
        %v2287 = vunpack.c.h.b16 %v2186
        %v2288 = vunpack.c.l.b16 %v2187
        %v2289 = vunpack.c.h.b16 %v2187
        %v2290 = vunpack.c.l.b16 %v2188
        %v2291 = vunpack.c.h.b16 %v2188
        %v2292 = vunpack.c.l.b16 %v2189
        %v2293 = vunpack.c.h.b16 %v2189
        %v2294 = vunpack.c.l.b16 %v2190
        %v2295 = vunpack.c.h.b16 %v2190
        %v2296 = vunpack.c.l.b16 %v2191
        %v2297 = vunpack.c.h.b16 %v2191
        %v2298 = vunpack.c.l.b16 %v2192
        %v2299 = vunpack.c.h.b16 %v2192
        %v2300 = vunpack.c.l.b16 %v2193
        %v2301 = vunpack.c.h.b16 %v2193
        %v2302 = vpack.c.b16 %v2240, %v2238
        %v2303 = vpack.c.b16 %v2241, %v2239
        %v2304 = vpack.c.b16 %v2244, %v2242
        %v2305 = vpack.c.b16 %v2245, %v2243
        %v2306 = vpack.c.b16 %v2248, %v2246
        %v2307 = vpack.c.b16 %v2249, %v2247
        %v2308 = vpack.c.b16 %v2252, %v2250
        %v2309 = vpack.c.b16 %v2253, %v2251
        %v2310 = vpack.c.b16 %v2256, %v2254
        %v2311 = vpack.c.b16 %v2257, %v2255
        %v2312 = vpack.c.b16 %v2260, %v2258
        %v2313 = vpack.c.b16 %v2261, %v2259
        %v2314 = vpack.c.b16 %v2264, %v2262
        %v2315 = vpack.c.b16 %v2265, %v2263
        %v2316 = vpack.c.b16 %v2268, %v2266
        %v2317 = vpack.c.b16 %v2269, %v2267
        %v2318 = vpack.c.b16 %v2272, %v2270
        %v2319 = vpack.c.b16 %v2273, %v2271
        %v2320 = vpack.c.b16 %v2276, %v2274
        %v2321 = vpack.c.b16 %v2277, %v2275
        %v2322 = vpack.c.b16 %v2280, %v2278
        %v2323 = vpack.c.b16 %v2281, %v2279
        %v2324 = vpack.c.b16 %v2284, %v2282
        %v2325 = vpack.c.b16 %v2285, %v2283
        %v2326 = vpack.c.b16 %v2288, %v2286
        %v2327 = vpack.c.b16 %v2289, %v2287
        %v2328 = vpack.c.b16 %v2292, %v2290
        %v2329 = vpack.c.b16 %v2293, %v2291
        %v2330 = vpack.c.b16 %v2296, %v2294
        %v2331 = vpack.c.b16 %v2297, %v2295
        %v2332 = vpack.c.b16 %v2300, %v2298
        %v2333 = vpack.c.b16 %v2301, %v2299
        %2366 = vmatprep.subr.bf16.mxu0 %v2303
        %2367 = vmatpush1.bf16.msra.mxu0 %v2302
        %2368 = vmatprep.subr.bf16.mxu0 %v2305
        %2369 = vmatpush1.bf16.msra.mxu0 %v2304
        %2370 = vmatprep.subr.bf16.mxu0 %v2307
        %2371 = vmatpush1.bf16.msra.mxu0 %v2306
        %2372 = vmatprep.subr.bf16.mxu0 %v2309
        %2373 = vmatpush1.bf16.msra.mxu0 %v2308
        %2374 = vmatprep.subr.bf16.mxu0 %v2311
        %2375 = vmatpush1.bf16.msra.mxu0 %v2310
        %2376 = vmatprep.subr.bf16.mxu0 %v2313
        %2377 = vmatpush1.bf16.msra.mxu0 %v2312
        %2378 = vmatprep.subr.bf16.mxu0 %v2315
        %2379 = vmatpush1.bf16.msra.mxu0 %v2314
        %2380 = vmatprep.subr.bf16.mxu0 %v2317
        %2381 = vmatpush1.bf16.msra.mxu0 %v2316
        %2382 = vmatprep.subr.bf16.mxu0 %v2319
        %2383 = vmatpush1.bf16.msra.mxu0 %v2318
        %2384 = vmatprep.subr.bf16.mxu0 %v2321
        %2385 = vmatpush1.bf16.msra.mxu0 %v2320
        %2386 = vmatprep.subr.bf16.mxu0 %v2323
        %2387 = vmatpush1.bf16.msra.mxu0 %v2322
        %2388 = vmatprep.subr.bf16.mxu0 %v2325
        %2389 = vmatpush1.bf16.msra.mxu0 %v2324
        %2390 = vmatprep.subr.bf16.mxu0 %v2327
        %2391 = vmatpush1.bf16.msra.mxu0 %v2326
        %2392 = vmatprep.subr.bf16.mxu0 %v2329
        %2393 = vmatpush1.bf16.msra.mxu0 %v2328
        %2394 = vmatprep.subr.bf16.mxu0 %v2331
        %2395 = vmatpush1.bf16.msra.mxu0 %v2330
        %2396 = vmatprep.subr.bf16.mxu0 %v2333
        %2397 = vmatpush1.bf16.msra.mxu0 %v2332
        %2398 = vmatprep.mubr.bf16.mxu0 %v2131
        %2399 = vmatmul.mubr.bf16.gmra.mrb[0].mxu0 %v2130
        %v2400 = vpop.f32.mrb[0].mxu0
        %v2401 = vadd.f32 %v2199, %v2400
        %v2402 = vpop.f32.mrb[0].mxu0
        %v2403 = vadd.f32 %v2203, %v2402
        %v2404 = vpop.f32.mrb[0].mxu0
        %v2405 = vadd.f32 %v2199, %v2404
        %v2406 = vpop.f32.mrb[0].mxu0
        %v2407 = vadd.f32 %v2203, %v2406
        %2408 = vmatprep.mubr.bf16.mxu0 %v2133
        %2409 = vmatmul.mubr.bf16.gmra.mrb[0].mxu0 %v2132
        %v2410 = vpop.f32.mrb[0].mxu0
        %v2411 = vadd.f32 %v2199, %v2410
        %v2412 = vpop.f32.mrb[0].mxu0
        %v2413 = vadd.f32 %v2203, %v2412
        %v2414 = vpop.f32.mrb[0].mxu0
        %v2415 = vadd.f32 %v2199, %v2414
        %v2416 = vpop.f32.mrb[0].mxu0
        %v2417 = vadd.f32 %v2203, %v2416
        %2418 = vmatprep.mubr.bf16.mxu0 %v2135
        %2419 = vmatmul.mubr.bf16.gmra.mrb[0].mxu0 %v2134
        %v2420 = vpop.f32.mrb[0].mxu0
        %v2421 = vadd.f32 %v2199, %v2420
        %v2422 = vpop.f32.mrb[0].mxu0
        %v2423 = vadd.f32 %v2203, %v2422
        %v2424 = vpop.f32.mrb[0].mxu0
        %v2425 = vadd.f32 %v2199, %v2424
        %v2426 = vpop.f32.mrb[0].mxu0
        %v2427 = vadd.f32 %v2203, %v2426
        %2428 = vmatprep.mubr.bf16.mxu0 %v2137
        %2429 = vmatmul.mubr.bf16.gmra.mrb[0].mxu0 %v2136
        %v2430 = vpop.f32.mrb[0].mxu0
        %v2431 = vadd.f32 %v2199, %v2430
        %v2432 = vpop.f32.mrb[0].mxu0
        %v2433 = vadd.f32 %v2203, %v2432
        %v2434 = vpop.f32.mrb[0].mxu0
        %v2435 = vadd.f32 %v2199, %v2434
        %v2436 = vpop.f32.mrb[0].mxu0
        %v2437 = vadd.f32 %v2203, %v2436
        %2438 = vmatprep.mubr.bf16.mxu0 %v2139
        %2439 = vmatmul.mubr.bf16.gmra.mrb[0].mxu0 %v2138
        %v2440 = vpop.f32.mrb[0].mxu0
        %v2441 = vadd.f32 %v2199, %v2440
        %v2442 = vpop.f32.mrb[0].mxu0
        %v2443 = vadd.f32 %v2203, %v2442
        %v2444 = vpop.f32.mrb[0].mxu0
        %v2445 = vadd.f32 %v2199, %v2444
        %v2446 = vpop.f32.mrb[0].mxu0
        %v2447 = vadd.f32 %v2203, %v2446
        %2448 = vmatprep.mubr.bf16.mxu0 %v2141
        %2449 = vmatmul.mubr.bf16.gmra.mrb[0].mxu0 %v2140
        %v2450 = vpop.f32.mrb[0].mxu0
        %v2451 = vadd.f32 %v2199, %v2450
        %v2452 = vpop.f32.mrb[0].mxu0
        %v2453 = vadd.f32 %v2203, %v2452
        %v2454 = vpop.f32.mrb[0].mxu0
        %v2455 = vadd.f32 %v2199, %v2454
        %v2456 = vpop.f32.mrb[0].mxu0
        %v2457 = vadd.f32 %v2203, %v2456
        %2458 = vmatprep.mubr.bf16.mxu0 %v2143
        %2459 = vmatmul.mubr.bf16.gmra.mrb[0].mxu0 %v2142
        %v2460 = vpop.f32.mrb[0].mxu0
        %v2461 = vadd.f32 %v2199, %v2460
        %v2462 = vpop.f32.mrb[0].mxu0
        %v2463 = vadd.f32 %v2203, %v2462
        %v2464 = vpop.f32.mrb[0].mxu0
        %v2465 = vadd.f32 %v2199, %v2464
        %v2466 = vpop.f32.mrb[0].mxu0
        %v2467 = vadd.f32 %v2203, %v2466
        %2468 = vmatprep.mubr.bf16.mxu0 %v2145
        %2469 = vmatmul.mubr.bf16.gmra.mrb[0].mxu0 %v2144
        %v2470 = vpop.f32.mrb[0].mxu0
        %v2471 = vadd.f32 %v2199, %v2470
        %v2472 = vpop.f32.mrb[0].mxu0
        %v2473 = vadd.f32 %v2203, %v2472
        %v2474 = vpop.f32.mrb[0].mxu0
        %v2475 = vadd.f32 %v2199, %v2474
        %v2476 = vpop.f32.mrb[0].mxu0
        %v2477 = vadd.f32 %v2203, %v2476
        %2478 = vmatprep.mubr.bf16.mxu0 %v2147
        %2479 = vmatmul.mubr.bf16.gmra.mrb[0].mxu0 %v2146
        %v2480 = vpop.f32.mrb[0].mxu0
        %v2481 = vadd.f32 %v2199, %v2480
        %v2482 = vpop.f32.mrb[0].mxu0
        %v2483 = vadd.f32 %v2203, %v2482
        %v2484 = vpop.f32.mrb[0].mxu0
        %v2485 = vadd.f32 %v2199, %v2484
        %v2486 = vpop.f32.mrb[0].mxu0
        %v2487 = vadd.f32 %v2203, %v2486
        %2488 = vmatprep.mubr.bf16.mxu0 %v2149
        %2489 = vmatmul.mubr.bf16.gmra.mrb[0].mxu0 %v2148
        %v2490 = vpop.f32.mrb[0].mxu0
        %v2491 = vadd.f32 %v2199, %v2490
        %v2492 = vpop.f32.mrb[0].mxu0
        %v2493 = vadd.f32 %v2203, %v2492
        %v2494 = vpop.f32.mrb[0].mxu0
        %v2495 = vadd.f32 %v2199, %v2494
        %v2496 = vpop.f32.mrb[0].mxu0
        %v2497 = vadd.f32 %v2203, %v2496
        %2498 = vmatprep.mubr.bf16.mxu0 %v2151
        %2499 = vmatmul.mubr.bf16.gmra.mrb[0].mxu0 %v2150
        %v2500 = vpop.f32.mrb[0].mxu0
        %v2501 = vadd.f32 %v2199, %v2500
        %v2502 = vpop.f32.mrb[0].mxu0
        %v2503 = vadd.f32 %v2203, %v2502
        %v2504 = vpop.f32.mrb[0].mxu0
        %v2505 = vadd.f32 %v2199, %v2504
        %v2506 = vpop.f32.mrb[0].mxu0
        %v2507 = vadd.f32 %v2203, %v2506
        %2508 = vmatprep.mubr.bf16.mxu0 %v2153
        %2509 = vmatmul.mubr.bf16.gmra.mrb[0].mxu0 %v2152
        %v2510 = vpop.f32.mrb[0].mxu0
        %v2511 = vadd.f32 %v2199, %v2510
        %v2512 = vpop.f32.mrb[0].mxu0
        %v2513 = vadd.f32 %v2203, %v2512
        %v2514 = vpop.f32.mrb[0].mxu0
        %v2515 = vadd.f32 %v2199, %v2514
        %v2516 = vpop.f32.mrb[0].mxu0
        %v2517 = vadd.f32 %v2203, %v2516
        %2518 = vmatprep.mubr.bf16.mxu0 %v2155
        %2519 = vmatmul.mubr.bf16.gmra.mrb[0].mxu0 %v2154
        %v2520 = vpop.f32.mrb[0].mxu0
        %v2521 = vadd.f32 %v2199, %v2520
        %v2522 = vpop.f32.mrb[0].mxu0
        %v2523 = vadd.f32 %v2203, %v2522
        %v2524 = vpop.f32.mrb[0].mxu0
        %v2525 = vadd.f32 %v2199, %v2524
        %v2526 = vpop.f32.mrb[0].mxu0
        %v2527 = vadd.f32 %v2203, %v2526
        %2528 = vmatprep.mubr.bf16.mxu0 %v2157
        %2529 = vmatmul.mubr.bf16.gmra.mrb[0].mxu0 %v2156
        %v2530 = vpop.f32.mrb[0].mxu0
        %v2531 = vadd.f32 %v2199, %v2530
        %v2532 = vpop.f32.mrb[0].mxu0
        %v2533 = vadd.f32 %v2203, %v2532
        %v2534 = vpop.f32.mrb[0].mxu0
        %v2535 = vadd.f32 %v2199, %v2534
        %v2536 = vpop.f32.mrb[0].mxu0
        %v2537 = vadd.f32 %v2203, %v2536
        %2538 = vmatprep.mubr.bf16.mxu0 %v2159
        %2539 = vmatmul.mubr.bf16.gmra.mrb[0].mxu0 %v2158
        %v2540 = vpop.f32.mrb[0].mxu0
        %v2541 = vadd.f32 %v2199, %v2540
        %v2542 = vpop.f32.mrb[0].mxu0
        %v2543 = vadd.f32 %v2203, %v2542
        %v2544 = vpop.f32.mrb[0].mxu0
        %v2545 = vadd.f32 %v2199, %v2544
        %v2546 = vpop.f32.mrb[0].mxu0
        %v2547 = vadd.f32 %v2203, %v2546
        %2548 = vmatprep.mubr.bf16.mxu0 %v2161
        %2549 = vmatmul.mubr.bf16.gmra.mrb[0].mxu0 %v2160
        %v2550 = vpop.f32.mrb[0].mxu0
        %v2551 = vadd.f32 %v2199, %v2550
        %v2552 = vpop.f32.mrb[0].mxu0
        %v2553 = vadd.f32 %v2203, %v2552
        %v2554 = vpop.f32.mrb[0].mxu0
        %v2555 = vadd.f32 %v2199, %v2554
        %v2556 = vpop.f32.mrb[0].mxu0
        %v2557 = vadd.f32 %v2203, %v2556
        %2558 = vdwg.mxu0
        %v2559 = vmax.f32 %v2401, %v2403
        %2560 = vmax.xlane.f32.xlu0 %v2559
        %v2561 = vpop.xlane.xlu0 %2560
        %v2562 = vmax.f32 %v2405, %v2407
        %2563 = vmax.xlane.f32.xlu0 %v2562
        %v2564 = vpop.xlane.xlu0 %2563
        %v2565 = vmax.f32 %v2411, %v2413
        %2566 = vmax.xlane.f32.xlu0 %v2565
        %v2567 = vpop.xlane.xlu0 %2566
        %v2568 = vmax.f32 %v2415, %v2417
        %2569 = vmax.xlane.f32.xlu0 %v2568
        %v2570 = vpop.xlane.xlu0 %2569
        %v2571 = vmax.f32 %v2421, %v2423
        %2572 = vmax.xlane.f32.xlu0 %v2571
        %v2573 = vpop.xlane.xlu0 %2572
        %v2574 = vmax.f32 %v2425, %v2427
        %2575 = vmax.xlane.f32.xlu0 %v2574
        %v2576 = vpop.xlane.xlu0 %2575
        %v2577 = vmax.f32 %v2431, %v2433
        %2578 = vmax.xlane.f32.xlu0 %v2577
        %v2579 = vpop.xlane.xlu0 %2578
        %v2580 = vmax.f32 %v2435, %v2437
        %2581 = vmax.xlane.f32.xlu0 %v2580
        %v2582 = vpop.xlane.xlu0 %2581
        %v2583 = vmax.f32 %v2441, %v2443
        %2584 = vmax.xlane.f32.xlu0 %v2583
        %v2585 = vpop.xlane.xlu0 %2584
        %v2586 = vmax.f32 %v2445, %v2447
        %2587 = vmax.xlane.f32.xlu0 %v2586
        %v2588 = vpop.xlane.xlu0 %2587
        %v2589 = vmax.f32 %v2451, %v2453
        %2590 = vmax.xlane.f32.xlu0 %v2589
        %v2591 = vpop.xlane.xlu0 %2590
        %v2592 = vmax.f32 %v2455, %v2457
        %2593 = vmax.xlane.f32.xlu0 %v2592
        %v2594 = vpop.xlane.xlu0 %2593
        %v2595 = vmax.f32 %v2461, %v2463
        %2596 = vmax.xlane.f32.xlu0 %v2595
        %v2597 = vpop.xlane.xlu0 %2596
        %v2598 = vmax.f32 %v2465, %v2467
        %2599 = vmax.xlane.f32.xlu0 %v2598
        %v2600 = vpop.xlane.xlu0 %2599
        %v2601 = vmax.f32 %v2471, %v2473
        %2602 = vmax.xlane.f32.xlu0 %v2601
        %v2603 = vpop.xlane.xlu0 %2602
        %v2604 = vmax.f32 %v2475, %v2477
        %2605 = vmax.xlane.f32.xlu0 %v2604
        %v2606 = vpop.xlane.xlu0 %2605
        %v2607 = vmax.f32 %v2481, %v2483
        %2608 = vmax.xlane.f32.xlu0 %v2607
        %v2609 = vpop.xlane.xlu0 %2608
        %v2610 = vmax.f32 %v2485, %v2487
        %2611 = vmax.xlane.f32.xlu0 %v2610
        %v2612 = vpop.xlane.xlu0 %2611
        %v2613 = vmax.f32 %v2491, %v2493
        %2614 = vmax.xlane.f32.xlu0 %v2613
        %v2615 = vpop.xlane.xlu0 %2614
        %v2616 = vmax.f32 %v2495, %v2497
        %2617 = vmax.xlane.f32.xlu0 %v2616
        %v2618 = vpop.xlane.xlu0 %2617
        %v2619 = vmax.f32 %v2501, %v2503
        %2620 = vmax.xlane.f32.xlu0 %v2619
        %v2621 = vpop.xlane.xlu0 %2620
        %v2622 = vmax.f32 %v2505, %v2507
        %2623 = vmax.xlane.f32.xlu0 %v2622
        %v2624 = vpop.xlane.xlu0 %2623
        %v2625 = vmax.f32 %v2511, %v2513
        %2626 = vmax.xlane.f32.xlu0 %v2625
        %v2627 = vpop.xlane.xlu0 %2626
        %v2628 = vmax.f32 %v2515, %v2517
        %2629 = vmax.xlane.f32.xlu0 %v2628
        %v2630 = vpop.xlane.xlu0 %2629
        %v2631 = vmax.f32 %v2521, %v2523
        %2632 = vmax.xlane.f32.xlu0 %v2631
        %v2633 = vpop.xlane.xlu0 %2632
        %v2634 = vmax.f32 %v2525, %v2527
        %2635 = vmax.xlane.f32.xlu0 %v2634
        %v2636 = vpop.xlane.xlu0 %2635
        %v2637 = vmax.f32 %v2531, %v2533
        %2638 = vmax.xlane.f32.xlu0 %v2637
        %v2639 = vpop.xlane.xlu0 %2638
        %v2640 = vmax.f32 %v2535, %v2537
        %2641 = vmax.xlane.f32.xlu0 %v2640
        %v2642 = vpop.xlane.xlu0 %2641
        %v2643 = vmax.f32 %v2541, %v2543
        %2644 = vmax.xlane.f32.xlu0 %v2643
        %v2645 = vpop.xlane.xlu0 %2644
        %v2646 = vmax.f32 %v2545, %v2547
        %2647 = vmax.xlane.f32.xlu0 %v2646
        %v2648 = vpop.xlane.xlu0 %2647
        %v2649 = vmax.f32 %v2551, %v2553
        %2650 = vmax.xlane.f32.xlu0 %v2649
        %v2651 = vpop.xlane.xlu0 %2650
        %v2652 = vmax.f32 %v2555, %v2557
        %2653 = vmax.xlane.f32.xlu0 %v2652
        %v2654 = vpop.xlane.xlu0 %2653
        %v2655 = vsub.f32 %v2401, %v2561
        %v2656 = vsub.f32 %v2403, %v2561
        %v2657 = vsub.f32 %v2405, %v2564
        %v2658 = vsub.f32 %v2407, %v2564
        %v2659 = vsub.f32 %v2411, %v2567
        %v2660 = vsub.f32 %v2413, %v2567
        %v2661 = vsub.f32 %v2415, %v2570
        %v2662 = vsub.f32 %v2417, %v2570
        %v2663 = vsub.f32 %v2421, %v2573
        %v2664 = vsub.f32 %v2423, %v2573
        %v2665 = vsub.f32 %v2425, %v2576
        %v2666 = vsub.f32 %v2427, %v2576
        %v2667 = vsub.f32 %v2431, %v2579
        %v2668 = vsub.f32 %v2433, %v2579
        %v2669 = vsub.f32 %v2435, %v2582
        %v2670 = vsub.f32 %v2437, %v2582
        %v2671 = vsub.f32 %v2441, %v2585
        %v2672 = vsub.f32 %v2443, %v2585
        %v2673 = vsub.f32 %v2445, %v2588
        %v2674 = vsub.f32 %v2447, %v2588
        %v2675 = vsub.f32 %v2451, %v2591
        %v2676 = vsub.f32 %v2453, %v2591
        %v2677 = vsub.f32 %v2455, %v2594
        %v2678 = vsub.f32 %v2457, %v2594
        %v2679 = vsub.f32 %v2461, %v2597
        %v2680 = vsub.f32 %v2463, %v2597
        %v2681 = vsub.f32 %v2465, %v2600
        %v2682 = vsub.f32 %v2467, %v2600
        %v2683 = vsub.f32 %v2471, %v2603
        %v2684 = vsub.f32 %v2473, %v2603
        %v2685 = vsub.f32 %v2475, %v2606
        %v2686 = vsub.f32 %v2477, %v2606
        %v2687 = vsub.f32 %v2481, %v2609
        %v2688 = vsub.f32 %v2483, %v2609
        %v2689 = vsub.f32 %v2485, %v2612
        %v2690 = vsub.f32 %v2487, %v2612
        %v2691 = vsub.f32 %v2491, %v2615
        %v2692 = vsub.f32 %v2493, %v2615
        %v2693 = vsub.f32 %v2495, %v2618
        %v2694 = vsub.f32 %v2497, %v2618
        %v2695 = vsub.f32 %v2501, %v2621
        %v2696 = vsub.f32 %v2503, %v2621
        %v2697 = vsub.f32 %v2505, %v2624
        %v2698 = vsub.f32 %v2507, %v2624
        %v2699 = vsub.f32 %v2511, %v2627
        %v2700 = vsub.f32 %v2513, %v2627
        %v2701 = vsub.f32 %v2515, %v2630
        %v2702 = vsub.f32 %v2517, %v2630
        %v2703 = vsub.f32 %v2521, %v2633
        %v2704 = vsub.f32 %v2523, %v2633
        %v2705 = vsub.f32 %v2525, %v2636
        %v2706 = vsub.f32 %v2527, %v2636
        %v2707 = vsub.f32 %v2531, %v2639
        %v2708 = vsub.f32 %v2533, %v2639
        %v2709 = vsub.f32 %v2535, %v2642
        %v2710 = vsub.f32 %v2537, %v2642
        %v2711 = vsub.f32 %v2541, %v2645
        %v2712 = vsub.f32 %v2543, %v2645
        %v2713 = vsub.f32 %v2545, %v2648
        %v2714 = vsub.f32 %v2547, %v2648
        %v2715 = vsub.f32 %v2551, %v2651
        %v2716 = vsub.f32 %v2553, %v2651
        %v2717 = vsub.f32 %v2555, %v2654
        %v2718 = vsub.f32 %v2557, %v2654
        %v2719 = vmul.f32 %v2655, 1.442695
        %v2720 = vpow.pop %v2719
        %v2721 = vmul.f32 %v2656, 1.442695
        %v2722 = vpow.pop %v2721
        %v2723 = vmul.f32 %v2657, 1.442695
        %v2724 = vpow.pop %v2723
        %v2725 = vmul.f32 %v2658, 1.442695
        %v2726 = vpow.pop %v2725
        %v2727 = vmul.f32 %v2659, 1.442695
        %v2728 = vpow.pop %v2727
        %v2729 = vmul.f32 %v2660, 1.442695
        %v2730 = vpow.pop %v2729
        %v2731 = vmul.f32 %v2661, 1.442695
        %v2732 = vpow.pop %v2731
        %v2733 = vmul.f32 %v2662, 1.442695
        %v2734 = vpow.pop %v2733
        %v2735 = vmul.f32 %v2663, 1.442695
        %v2736 = vpow.pop %v2735
        %v2737 = vmul.f32 %v2664, 1.442695
        %v2738 = vpow.pop %v2737
        %v2739 = vmul.f32 %v2665, 1.442695
        %v2740 = vpow.pop %v2739
        %v2741 = vmul.f32 %v2666, 1.442695
        %v2742 = vpow.pop %v2741
        %v2743 = vmul.f32 %v2667, 1.442695
        %v2744 = vpow.pop %v2743
        %v2745 = vmul.f32 %v2668, 1.442695
        %v2746 = vpow.pop %v2745
        %v2747 = vmul.f32 %v2669, 1.442695
        %v2748 = vpow.pop %v2747
        %v2749 = vmul.f32 %v2670, 1.442695
        %v2750 = vpow.pop %v2749
        %v2751 = vmul.f32 %v2671, 1.442695
        %v2752 = vpow.pop %v2751
        %v2753 = vmul.f32 %v2672, 1.442695
        %v2754 = vpow.pop %v2753
        %v2755 = vmul.f32 %v2673, 1.442695
        %v2756 = vpow.pop %v2755
        %v2757 = vmul.f32 %v2674, 1.442695
        %v2758 = vpow.pop %v2757
        %v2759 = vmul.f32 %v2675, 1.442695
        %v2760 = vpow.pop %v2759
        %v2761 = vmul.f32 %v2676, 1.442695
        %v2762 = vpow.pop %v2761
        %v2763 = vmul.f32 %v2677, 1.442695
        %v2764 = vpow.pop %v2763
        %v2765 = vmul.f32 %v2678, 1.442695
        %v2766 = vpow.pop %v2765
        %v2767 = vmul.f32 %v2679, 1.442695
        %v2768 = vpow.pop %v2767
        %v2769 = vmul.f32 %v2680, 1.442695
        %v2770 = vpow.pop %v2769
        %v2771 = vmul.f32 %v2681, 1.442695
        %v2772 = vpow.pop %v2771
        %v2773 = vmul.f32 %v2682, 1.442695
        %v2774 = vpow.pop %v2773
        %v2775 = vmul.f32 %v2683, 1.442695
        %v2776 = vpow.pop %v2775
        %v2777 = vmul.f32 %v2684, 1.442695
        %v2778 = vpow.pop %v2777
        %v2779 = vmul.f32 %v2685, 1.442695
        %v2780 = vpow.pop %v2779
        %v2781 = vmul.f32 %v2686, 1.442695
        %v2782 = vpow.pop %v2781
        %v2783 = vmul.f32 %v2687, 1.442695
        %v2784 = vpow.pop %v2783
        %v2785 = vmul.f32 %v2688, 1.442695
        %v2786 = vpow.pop %v2785
        %v2787 = vmul.f32 %v2689, 1.442695
        %v2788 = vpow.pop %v2787
        %v2789 = vmul.f32 %v2690, 1.442695
        %v2790 = vpow.pop %v2789
        %v2791 = vmul.f32 %v2691, 1.442695
        %v2792 = vpow.pop %v2791
        %v2793 = vmul.f32 %v2692, 1.442695
        %v2794 = vpow.pop %v2793
        %v2795 = vmul.f32 %v2693, 1.442695
        %v2796 = vpow.pop %v2795
        %v2797 = vmul.f32 %v2694, 1.442695
        %v2798 = vpow.pop %v2797
        %v2799 = vmul.f32 %v2695, 1.442695
        %v2800 = vpow.pop %v2799
        %v2801 = vmul.f32 %v2696, 1.442695
        %v2802 = vpow.pop %v2801
        %v2803 = vmul.f32 %v2697, 1.442695
        %v2804 = vpow.pop %v2803
        %v2805 = vmul.f32 %v2698, 1.442695
        %v2806 = vpow.pop %v2805
        %v2807 = vmul.f32 %v2699, 1.442695
        %v2808 = vpow.pop %v2807
        %v2809 = vmul.f32 %v2700, 1.442695
        %v2810 = vpow.pop %v2809
        %v2811 = vmul.f32 %v2701, 1.442695
        %v2812 = vpow.pop %v2811
        %v2813 = vmul.f32 %v2702, 1.442695
        %v2814 = vpow.pop %v2813
        %v2815 = vmul.f32 %v2703, 1.442695
        %v2816 = vpow.pop %v2815
        %v2817 = vmul.f32 %v2704, 1.442695
        %v2818 = vpow.pop %v2817
        %v2819 = vmul.f32 %v2705, 1.442695
        %v2820 = vpow.pop %v2819
        %v2821 = vmul.f32 %v2706, 1.442695
        %v2822 = vpow.pop %v2821
        %v2823 = vmul.f32 %v2707, 1.442695
        %v2824 = vpow.pop %v2823
        %v2825 = vmul.f32 %v2708, 1.442695
        %v2826 = vpow.pop %v2825
        %v2827 = vmul.f32 %v2709, 1.442695
        %v2828 = vpow.pop %v2827
        %v2829 = vmul.f32 %v2710, 1.442695
        %v2830 = vpow.pop %v2829
        %v2831 = vmul.f32 %v2711, 1.442695
        %v2832 = vpow.pop %v2831
        %v2833 = vmul.f32 %v2712, 1.442695
        %v2834 = vpow.pop %v2833
        %v2835 = vmul.f32 %v2713, 1.442695
        %v2836 = vpow.pop %v2835
        %v2837 = vmul.f32 %v2714, 1.442695
        %v2838 = vpow.pop %v2837
        %v2839 = vmul.f32 %v2715, 1.442695
        %v2840 = vpow.pop %v2839
        %v2841 = vmul.f32 %v2716, 1.442695
        %v2842 = vpow.pop %v2841
        %v2843 = vmul.f32 %v2717, 1.442695
        %v2844 = vpow.pop %v2843
        %v2845 = vmul.f32 %v2718, 1.442695
        %v2846 = vpow.pop %v2845
        %v2847 = vadd.f32 %v2720, %v2722
        %2848 = vadd.xlane.f32.xlu0 %v2847
        %v2849 = vpop.xlane.xlu0 %2848
        %v2850 = vadd.f32 %v2724, %v2726
        %2851 = vadd.xlane.f32.xlu0 %v2850
        %v2852 = vpop.xlane.xlu0 %2851
        %v2853 = vadd.f32 %v2728, %v2730
        %2854 = vadd.xlane.f32.xlu0 %v2853
        %v2855 = vpop.xlane.xlu0 %2854
        %v2856 = vadd.f32 %v2732, %v2734
        %2857 = vadd.xlane.f32.xlu0 %v2856
        %v2858 = vpop.xlane.xlu0 %2857
        %v2859 = vadd.f32 %v2736, %v2738
        %2860 = vadd.xlane.f32.xlu0 %v2859
        %v2861 = vpop.xlane.xlu0 %2860
        %v2862 = vadd.f32 %v2740, %v2742
        %2863 = vadd.xlane.f32.xlu0 %v2862
        %v2864 = vpop.xlane.xlu0 %2863
        %v2865 = vadd.f32 %v2744, %v2746
        %2866 = vadd.xlane.f32.xlu0 %v2865
        %v2867 = vpop.xlane.xlu0 %2866
        %v2868 = vadd.f32 %v2748, %v2750
        %2869 = vadd.xlane.f32.xlu0 %v2868
        %v2870 = vpop.xlane.xlu0 %2869
        %v2871 = vadd.f32 %v2752, %v2754
        %2872 = vadd.xlane.f32.xlu0 %v2871
        %v2873 = vpop.xlane.xlu0 %2872
        %v2874 = vadd.f32 %v2756, %v2758
        %2875 = vadd.xlane.f32.xlu0 %v2874
        %v2876 = vpop.xlane.xlu0 %2875
        %v2877 = vadd.f32 %v2760, %v2762
        %2878 = vadd.xlane.f32.xlu0 %v2877
        %v2879 = vpop.xlane.xlu0 %2878
        %v2880 = vadd.f32 %v2764, %v2766
        %2881 = vadd.xlane.f32.xlu0 %v2880
        %v2882 = vpop.xlane.xlu0 %2881
        %v2883 = vadd.f32 %v2768, %v2770
        %2884 = vadd.xlane.f32.xlu0 %v2883
        %v2885 = vpop.xlane.xlu0 %2884
        %v2886 = vadd.f32 %v2772, %v2774
        %2887 = vadd.xlane.f32.xlu0 %v2886
        %v2888 = vpop.xlane.xlu0 %2887
        %v2889 = vadd.f32 %v2776, %v2778
        %2890 = vadd.xlane.f32.xlu0 %v2889
        %v2891 = vpop.xlane.xlu0 %2890
        %v2892 = vadd.f32 %v2780, %v2782
        %2893 = vadd.xlane.f32.xlu0 %v2892
        %v2894 = vpop.xlane.xlu0 %2893
        %v2895 = vadd.f32 %v2784, %v2786
        %2896 = vadd.xlane.f32.xlu0 %v2895
        %v2897 = vpop.xlane.xlu0 %2896
        %v2898 = vadd.f32 %v2788, %v2790
        %2899 = vadd.xlane.f32.xlu0 %v2898
        %v2900 = vpop.xlane.xlu0 %2899
        %v2901 = vadd.f32 %v2792, %v2794
        %2902 = vadd.xlane.f32.xlu0 %v2901
        %v2903 = vpop.xlane.xlu0 %2902
        %v2904 = vadd.f32 %v2796, %v2798
        %2905 = vadd.xlane.f32.xlu0 %v2904
        %v2906 = vpop.xlane.xlu0 %2905
        %v2907 = vadd.f32 %v2800, %v2802
        %2908 = vadd.xlane.f32.xlu0 %v2907
        %v2909 = vpop.xlane.xlu0 %2908
        %v2910 = vadd.f32 %v2804, %v2806
        %2911 = vadd.xlane.f32.xlu0 %v2910
        %v2912 = vpop.xlane.xlu0 %2911
        %v2913 = vadd.f32 %v2808, %v2810
        %2914 = vadd.xlane.f32.xlu0 %v2913
        %v2915 = vpop.xlane.xlu0 %2914
        %v2916 = vadd.f32 %v2812, %v2814
        %2917 = vadd.xlane.f32.xlu0 %v2916
        %v2918 = vpop.xlane.xlu0 %2917
        %v2919 = vadd.f32 %v2816, %v2818
        %2920 = vadd.xlane.f32.xlu0 %v2919
        %v2921 = vpop.xlane.xlu0 %2920
        %v2922 = vadd.f32 %v2820, %v2822
        %2923 = vadd.xlane.f32.xlu0 %v2922
        %v2924 = vpop.xlane.xlu0 %2923
        %v2925 = vadd.f32 %v2824, %v2826
        %2926 = vadd.xlane.f32.xlu0 %v2925
        %v2927 = vpop.xlane.xlu0 %2926
        %v2928 = vadd.f32 %v2828, %v2830
        %2929 = vadd.xlane.f32.xlu0 %v2928
        %v2930 = vpop.xlane.xlu0 %2929
        %v2931 = vadd.f32 %v2832, %v2834
        %2932 = vadd.xlane.f32.xlu0 %v2931
        %v2933 = vpop.xlane.xlu0 %2932
        %v2934 = vadd.f32 %v2836, %v2838
        %2935 = vadd.xlane.f32.xlu0 %v2934
        %v2936 = vpop.xlane.xlu0 %2935
        %v2937 = vadd.f32 %v2840, %v2842
        %2938 = vadd.xlane.f32.xlu0 %v2937
        %v2939 = vpop.xlane.xlu0 %2938
        %v2940 = vadd.f32 %v2844, %v2846
        %2941 = vadd.xlane.f32.xlu0 %v2940
        %v2942 = vpop.xlane.xlu0 %2941
        %v2943 = vlog2.pop %v2849
        %v2944 = vmul.f32 %v2943, 0.6931472
        %v2945 = vlog2.pop %v2852
        %v2946 = vmul.f32 %v2945, 0.6931472
        %v2947 = vlog2.pop %v2855
        %v2948 = vmul.f32 %v2947, 0.6931472
        %v2949 = vlog2.pop %v2858
        %v2950 = vmul.f32 %v2949, 0.6931472
        %v2951 = vlog2.pop %v2861
        %v2952 = vmul.f32 %v2951, 0.6931472
        %v2953 = vlog2.pop %v2864
        %v2954 = vmul.f32 %v2953, 0.6931472
        %v2955 = vlog2.pop %v2867
        %v2956 = vmul.f32 %v2955, 0.6931472
        %v2957 = vlog2.pop %v2870
        %v2958 = vmul.f32 %v2957, 0.6931472
        %v2959 = vlog2.pop %v2873
        %v2960 = vmul.f32 %v2959, 0.6931472
        %v2961 = vlog2.pop %v2876
        %v2962 = vmul.f32 %v2961, 0.6931472
        %v2963 = vlog2.pop %v2879
        %v2964 = vmul.f32 %v2963, 0.6931472
        %v2965 = vlog2.pop %v2882
        %v2966 = vmul.f32 %v2965, 0.6931472
        %v2967 = vlog2.pop %v2885
        %v2968 = vmul.f32 %v2967, 0.6931472
        %v2969 = vlog2.pop %v2888
        %v2970 = vmul.f32 %v2969, 0.6931472
        %v2971 = vlog2.pop %v2891
        %v2972 = vmul.f32 %v2971, 0.6931472
        %v2973 = vlog2.pop %v2894
        %v2974 = vmul.f32 %v2973, 0.6931472
        %v2975 = vlog2.pop %v2897
        %v2976 = vmul.f32 %v2975, 0.6931472
        %v2977 = vlog2.pop %v2900
        %v2978 = vmul.f32 %v2977, 0.6931472
        %v2979 = vlog2.pop %v2903
        %v2980 = vmul.f32 %v2979, 0.6931472
        %v2981 = vlog2.pop %v2906
        %v2982 = vmul.f32 %v2981, 0.6931472
        %v2983 = vlog2.pop %v2909
        %v2984 = vmul.f32 %v2983, 0.6931472
        %v2985 = vlog2.pop %v2912
        %v2986 = vmul.f32 %v2985, 0.6931472
        %v2987 = vlog2.pop %v2915
        %v2988 = vmul.f32 %v2987, 0.6931472
        %v2989 = vlog2.pop %v2918
        %v2990 = vmul.f32 %v2989, 0.6931472
        %v2991 = vlog2.pop %v2921
        %v2992 = vmul.f32 %v2991, 0.6931472
        %v2993 = vlog2.pop %v2924
        %v2994 = vmul.f32 %v2993, 0.6931472
        %v2995 = vlog2.pop %v2927
        %v2996 = vmul.f32 %v2995, 0.6931472
        %v2997 = vlog2.pop %v2930
        %v2998 = vmul.f32 %v2997, 0.6931472
        %v2999 = vlog2.pop %v2933
        %v3000 = vmul.f32 %v2999, 0.6931472
        %v3001 = vlog2.pop %v2936
        %v3002 = vmul.f32 %v3001, 0.6931472
        %v3003 = vlog2.pop %v2939
        %v3004 = vmul.f32 %v3003, 0.6931472
        %v3005 = vlog2.pop %v2942
        %v3006 = vmul.f32 %v3005, 0.6931472
        %v3007 = vsub.f32 %v2655, %v2944
        %v3008 = vsub.f32 %v2656, %v2944
        %v3009 = vsub.f32 %v2657, %v2946
        %v3010 = vsub.f32 %v2658, %v2946
        %v3011 = vsub.f32 %v2659, %v2948
        %v3012 = vsub.f32 %v2660, %v2948
        %v3013 = vsub.f32 %v2661, %v2950
        %v3014 = vsub.f32 %v2662, %v2950
        %v3015 = vsub.f32 %v2663, %v2952
        %v3016 = vsub.f32 %v2664, %v2952
        %v3017 = vsub.f32 %v2665, %v2954
        %v3018 = vsub.f32 %v2666, %v2954
        %v3019 = vsub.f32 %v2667, %v2956
        %v3020 = vsub.f32 %v2668, %v2956
        %v3021 = vsub.f32 %v2669, %v2958
        %v3022 = vsub.f32 %v2670, %v2958
        %v3023 = vsub.f32 %v2671, %v2960
        %v3024 = vsub.f32 %v2672, %v2960
        %v3025 = vsub.f32 %v2673, %v2962
        %v3026 = vsub.f32 %v2674, %v2962
        %v3027 = vsub.f32 %v2675, %v2964
        %v3028 = vsub.f32 %v2676, %v2964
        %v3029 = vsub.f32 %v2677, %v2966
        %v3030 = vsub.f32 %v2678, %v2966
        %v3031 = vsub.f32 %v2679, %v2968
        %v3032 = vsub.f32 %v2680, %v2968
        %v3033 = vsub.f32 %v2681, %v2970
        %v3034 = vsub.f32 %v2682, %v2970
        %v3035 = vsub.f32 %v2683, %v2972
        %v3036 = vsub.f32 %v2684, %v2972
        %v3037 = vsub.f32 %v2685, %v2974
        %v3038 = vsub.f32 %v2686, %v2974
        %v3039 = vsub.f32 %v2687, %v2976
        %v3040 = vsub.f32 %v2688, %v2976
        %v3041 = vsub.f32 %v2689, %v2978
        %v3042 = vsub.f32 %v2690, %v2978
        %v3043 = vsub.f32 %v2691, %v2980
        %v3044 = vsub.f32 %v2692, %v2980
        %v3045 = vsub.f32 %v2693, %v2982
        %v3046 = vsub.f32 %v2694, %v2982
        %v3047 = vsub.f32 %v2695, %v2984
        %v3048 = vsub.f32 %v2696, %v2984
        %v3049 = vsub.f32 %v2697, %v2986
        %v3050 = vsub.f32 %v2698, %v2986
        %v3051 = vsub.f32 %v2699, %v2988
        %v3052 = vsub.f32 %v2700, %v2988
        %v3053 = vsub.f32 %v2701, %v2990
        %v3054 = vsub.f32 %v2702, %v2990
        %v3055 = vsub.f32 %v2703, %v2992
        %v3056 = vsub.f32 %v2704, %v2992
        %v3057 = vsub.f32 %v2705, %v2994
        %v3058 = vsub.f32 %v2706, %v2994
        %v3059 = vsub.f32 %v2707, %v2996
        %v3060 = vsub.f32 %v2708, %v2996
        %v3061 = vsub.f32 %v2709, %v2998
        %v3062 = vsub.f32 %v2710, %v2998
        %v3063 = vsub.f32 %v2711, %v3000
        %v3064 = vsub.f32 %v2712, %v3000
        %v3065 = vsub.f32 %v2713, %v3002
        %v3066 = vsub.f32 %v2714, %v3002
        %v3067 = vsub.f32 %v2715, %v3004
        %v3068 = vsub.f32 %v2716, %v3004
        %v3069 = vsub.f32 %v2717, %v3006
        %v3070 = vsub.f32 %v2718, %v3006
        %3071 = vst [vmem:[%s245] sm:$0xff] %v3007
        %3072 = vst [vmem:[%s245 + $0x8] sm:$0xff] %v3008
        %3073 = vst [vmem:[%s245 + $0x10] sm:$0xff] %v3009
        %3074 = vst [vmem:[%s245 + $0x18] sm:$0xff] %v3010
        %3075 = vst [vmem:[%s245 + $0x20] sm:$0xff] %v3011
        %3076 = vst [vmem:[%s245 + $0x28] sm:$0xff] %v3012
        %3077 = vst [vmem:[%s245 + $0x30] sm:$0xff] %v3013
        %3078 = vst [vmem:[%s245 + $0x38] sm:$0xff] %v3014
        %3079 = vst [vmem:[%s245 + $0x40] sm:$0xff] %v3015
        %3080 = vst [vmem:[%s245 + $0x48] sm:$0xff] %v3016
        %3081 = vst [vmem:[%s245 + $0x50] sm:$0xff] %v3017
        %3082 = vst [vmem:[%s245 + $0x58] sm:$0xff] %v3018
        %3083 = vst [vmem:[%s245 + $0x60] sm:$0xff] %v3019
        %3084 = vst [vmem:[%s245 + $0x68] sm:$0xff] %v3020
        %3085 = vst [vmem:[%s245 + $0x70] sm:$0xff] %v3021
        %3086 = vst [vmem:[%s245 + $0x78] sm:$0xff] %v3022
        %3087 = vst [vmem:[%s245 + $0x80] sm:$0xff] %v3023
        %3088 = vst [vmem:[%s245 + $0x88] sm:$0xff] %v3024
        %3089 = vst [vmem:[%s245 + $0x90] sm:$0xff] %v3025
        %3090 = vst [vmem:[%s245 + $0x98] sm:$0xff] %v3026
        %3091 = vst [vmem:[%s245 + $0xa0] sm:$0xff] %v3027
        %3092 = vst [vmem:[%s245 + $0xa8] sm:$0xff] %v3028
        %3093 = vst [vmem:[%s245 + $0xb0] sm:$0xff] %v3029
        %3094 = vst [vmem:[%s245 + $0xb8] sm:$0xff] %v3030
        %3095 = vst [vmem:[%s245 + $0xc0] sm:$0xff] %v3031
        %3096 = vst [vmem:[%s245 + $0xc8] sm:$0xff] %v3032
        %3097 = vst [vmem:[%s245 + $0xd0] sm:$0xff] %v3033
        %3098 = vst [vmem:[%s245 + $0xd8] sm:$0xff] %v3034
        %3099 = vst [vmem:[%s245 + $0xe0] sm:$0xff] %v3035
        %3100 = vst [vmem:[%s245 + $0xe8] sm:$0xff] %v3036
        %3101 = vst [vmem:[%s245 + $0xf0] sm:$0xff] %v3037
        %3102 = vst [vmem:[%s245 + $0xf8] sm:$0xff] %v3038
        %3103 = vst [vmem:[%s245 + $0x100] sm:$0xff] %v3039
        %3104 = vst [vmem:[%s245 + $0x108] sm:$0xff] %v3040
        %3105 = vst [vmem:[%s245 + $0x110] sm:$0xff] %v3041
        %3106 = vst [vmem:[%s245 + $0x118] sm:$0xff] %v3042
        %3107 = vst [vmem:[%s245 + $0x120] sm:$0xff] %v3043
        %3108 = vst [vmem:[%s245 + $0x128] sm:$0xff] %v3044
        %3109 = vst [vmem:[%s245 + $0x130] sm:$0xff] %v3045
        %3110 = vst [vmem:[%s245 + $0x138] sm:$0xff] %v3046
        %3111 = vst [vmem:[%s245 + $0x140] sm:$0xff] %v3047
        %3112 = vst [vmem:[%s245 + $0x148] sm:$0xff] %v3048
        %3113 = vst [vmem:[%s245 + $0x150] sm:$0xff] %v3049
        %3114 = vst [vmem:[%s245 + $0x158] sm:$0xff] %v3050
        %3115 = vst [vmem:[%s245 + $0x160] sm:$0xff] %v3051
        %3116 = vst [vmem:[%s245 + $0x168] sm:$0xff] %v3052
        %3117 = vst [vmem:[%s245 + $0x170] sm:$0xff] %v3053
        %3118 = vst [vmem:[%s245 + $0x178] sm:$0xff] %v3054
        %3119 = vst [vmem:[%s245 + $0x180] sm:$0xff] %v3055
        %3120 = vst [vmem:[%s245 + $0x188] sm:$0xff] %v3056
        %3121 = vst [vmem:[%s245 + $0x190] sm:$0xff] %v3057
        %3122 = vst [vmem:[%s245 + $0x198] sm:$0xff] %v3058
        %3123 = vst [vmem:[%s245 + $0x1a0] sm:$0xff] %v3059
        %3124 = vst [vmem:[%s245 + $0x1a8] sm:$0xff] %v3060
        %3125 = vst [vmem:[%s245 + $0x1b0] sm:$0xff] %v3061
        %3126 = vst [vmem:[%s245 + $0x1b8] sm:$0xff] %v3062
        %3127 = vst [vmem:[%s245 + $0x1c0] sm:$0xff] %v3063
        %3128 = vst [vmem:[%s245 + $0x1c8] sm:$0xff] %v3064
        %3129 = vst [vmem:[%s245 + $0x1d0] sm:$0xff] %v3065
        %3130 = vst [vmem:[%s245 + $0x1d8] sm:$0xff] %v3066
        %3131 = vst [vmem:[%s245 + $0x1e0] sm:$0xff] %v3067
        %3132 = vst [vmem:[%s245 + $0x1e8] sm:$0xff] %v3068
        %3133 = vst [vmem:[%s245 + $0x1f0] sm:$0xff] %v3069
        %3134 = vst [vmem:[%s245 + $0x1f8] sm:$0xff] %v3070
        %s3135 = sand.u32 %s159, 1
        %s3136 = scalar_lea.sflag [#allocation3], %s3135
        %s3137 = sand.u32 %s159, 1
        %s3138 = smul.addr %s3137, 512
        %s3139 = scalar_lea.vmem [#allocation2], %s3138
        // Predicated region
        $region45: #{tpu_custom_call.1} parent=43 // pred_check
          %p3140 = pneg %p169
        $region46: #{tpu_custom_call.1} parent=43 // pred_check_branch
          %3142 = sbr.rel (%p3140) target = $region48
        $region47: #{tpu_custom_call.1} parent=43 // pred_region
          %s3143 = smul.u32 32, %s20
          %s3145 = ssub.s32 8192, 8192
          %3146 = vsyncadd %s3136, %s3145
          %s3147 = smul.addr %s3143, 2
          %s3148 = smul.addr %s3147, 128
          %s3149 = scalar_lea.hbm %s6, %s3148
          %s3150 = sshll.u32 %s3139, 4
          %s3151 = int_to_ptr.vmem [resolvable:$true] %s3150
          %3156 = dma.vmem_to_hbm [thread:$0]  %s3151, 8192, %s3149, %s3136, 256, 256, 16
        $region48: #{tpu_custom_call.1} parent=43 // pred_fallthru
          _
      $region44: #{tpu_custom_call.1} parent=5 // pred_fallthru
        _
      %p3157 = scmp.le.s32.totalorder 2, %s15
      // Predicated region
      $region49: #{tpu_custom_call.1} parent=5 // pred_check
        %p3158 = pneg %p3157
      $region50: #{tpu_custom_call.1} parent=5 // pred_check_branch
        %3160 = sbr.rel (%p3158) target = $region52
      $region51: #{tpu_custom_call.1} parent=5 // pred_region
        %s3161 = ssub.s32 %s15, 2
        // Predicated region
        $region53: #{tpu_custom_call.1} parent=51 // pred_check
          %p3162 = pneg %p175
        $region54: #{tpu_custom_call.1} parent=51 // pred_check_branch
          %3164 = sbr.rel (%p3162) target = $region56
        $region55: #{tpu_custom_call.1} parent=51 // pred_region
          %s3165 = sand.u32 %s160, 1
          %s3166 = scalar_lea.sflag [#allocation3], %s3165
          %s3167 = sand.u32 %s160, 1
          %s3168 = smul.addr %s3167, 512
          %s3169 = scalar_lea.vmem [#allocation2], %s3168
          %3170 = dma.done %s3166, 8192
        $region56: #{tpu_custom_call.1} parent=51 // pred_fallthru
          _
      $region52: #{tpu_custom_call.1} parent=5 // pred_fallthru
        _
    $region6: #{tpu_custom_call.1} parent=1 // loop_footer
      %s19 = sadd.s32 1, %s15
    $region7: #{tpu_custom_call.1} parent=1 // loop_footer_branch
      %14 = sbr.rel target = $region3
    $region8: #{tpu_custom_call.1} parent=1 // loop_exit
      _
    %3171 = vsyncpa [#allocation3], 1
    %s3172 = scalar_lea.sflag [#allocation3], 1
    %3173 = vsyncpa %s3172, 1

</llo_original>
